<compile_context>
chip_gen: v7x
topology: tpu7x:2x2x1
jax: 0.10.0
libtpu: 0.0.40
codegen_flags: <defaults>
</compile_context>

<pallas_src>
import jax
import jax.numpy as jnp
from jax import lax
from jax.experimental import pallas as pl
from jax.experimental.pallas import tpu as pltpu

_LANE = 128


def _resblock_kernel(xm_ref, xh_ref, w3_ref, b_ref, o_ref):
    # xm_ref: (1, TILE_H, W+2, Cp) bf16 -- padded-image rows [j*TH, j*TH+TH)
    # xh_ref: (1, 2,      W+2, Cp) bf16 -- bottom halo rows  [j*TH+TH, +2)
    # w3_ref: (3, 3*Cp, Cp)        bf16 -- per-dw weights, K = (dh, Cin) folded
    # b_ref : (1, Cp)              f32
    # o_ref : (1, TILE_H*W, Cp)    bf16
    th, wp, cp = xm_ref.shape[1], xm_ref.shape[2], xm_ref.shape[3]
    w = wp - 2
    m = th * w

    rows = jnp.concatenate([xm_ref[0], xh_ref[0]], axis=0)     # (TH+2, W+2, Cp)
    # Fold the 3 dh taps into the contraction axis: K = 3*Cp.
    x3 = jnp.concatenate([rows[d:d + th] for d in range(3)], axis=-1)

    acc = jnp.zeros((m, cp), jnp.float32)
    for dw in range(3):                        # 3 MXU matmuls, K = 3*Cp each
        patch = x3[:, dw:dw + w, :].reshape(m, 3 * cp)
        acc = acc + jnp.dot(patch, w3_ref[dw],
                            preferred_element_type=jnp.float32)

    # Residual = centre tap already resident in VMEM (no second HBM read).
    res = rows[1:th + 1, 1:w + 1, :].reshape(m, cp).astype(jnp.float32)
    y = acc + b_ref[...] + res

    # Numerically safe SiLU; the reciprocal runs on the EUP slot.
    e = jnp.exp(jnp.minimum(-y, 30.0))
    o_ref[0] = (y * pl.reciprocal(1.0 + e, approx=True)).astype(o_ref.dtype)


def _vmem_capacity_bytes():
    try:
        return int(pltpu.get_tpu_info().vmem_capacity_bytes)
    except Exception:
        return 64 * 1024 * 1024       # conservative: v7x per-TC VMEM


def _step_vmem_bytes(th, w, cp):
    """Rough per-grid-step footprint: double-buffered blocks + in-kernel temps."""
    wp = w + 2
    blk_in = th * wp * cp * 2             # bf16 main input block
    blk_out = th * w * cp * 2             # bf16 output block
    halo = 2 * wp * cp * 2
    weights = 9 * cp * cp * 2
    pipelined = 2 * (blk_in + halo + blk_out + weights + cp * 4)
    temps = (blk_in                        # rows (main + halo)
             + 3 * blk_in                  # x3 with K = 3*Cp lanes
             + 2 * 3 * th * w * cp * 2     # live dw patches
             + 3 * th * w * cp * 4)        # f32 accumulator / residual / epilogue
    return pipelined + temps


def _pick_tile_h(n, h, w, cp, budget):
    """Largest even divisor of h that fits the VMEM budget; prefer >=2 blocks."""
    cands = [th for th in range(h, 0, -1)
             if h % th == 0 and th % 2 == 0
             and ((th * w) % 8 == 0 or th == h)]        # sublane-clean output block
    feas = [th for th in cands if _step_vmem_bytes(th, w, cp) <= budget]
    if not feas:
        feas = [cands[-1]]                 # smallest tile; rely on vmem_limit
    for th in feas:                        # >=2 total blocks keeps both v7x TCs busy
        if n * (h // th) >= 2:
            return th
    return feas[0]


@jax.jit
def resblock_alt(x_nchw, w_oihw, bias):
    """Pallas TPU implementation of silu(conv3x3(x) + x). NCHW in / NCHW out."""
    n, c, h, w = x_nchw.shape
    # TODO(synk): for genuinely small C (<<128) a layout folding W into the lane
    # axis would avoid the Cp zero-padding waste; not implemented here.
    cp = -(-c // _LANE) * _LANE
    wp = w + 2
    h2 = h + (h % 2)                       # even row count (extra zero row if odd)

    cap = _vmem_capacity_bytes()
    vmem_limit = min(int(cap * 0.85), 100 * 1024 * 1024)
    tile_h = _pick_tile_h(n, h2, w, cp, budget=int(vmem_limit * 0.6))
    num_t = h2 // tile_h
    m_blk = tile_h * w

    # NCHW -> NHWC, bf16; pad: 1 top row, (h2-h)+tile_h-1 bottom zero rows (keeps
    # every block fully in bounds), 1 col each side, channels to a lane multiple.
    x_nhwc = jnp.transpose(x_nchw, (0, 2, 3, 1)).astype(jnp.bfloat16)
    x_pad = jnp.pad(x_nhwc,
                    ((0, 0), (1, (h2 - h) + tile_h - 1), (1, 1), (0, cp - c)))

    # (O,I,kh,kw) -> per-dw matrices with (dh, Cin) merged into K = 3*Cp.
    w_t = jnp.transpose(w_oihw, (2, 3, 1, 0))                     # (kh,kw,Ci,Co)
    w_t = jnp.pad(w_t, ((0, 0), (0, 0), (0, cp - c), (0, cp - c)))
    w3 = jnp.transpose(w_t, (1, 0, 2, 3)).reshape(3, 3 * cp, cp).astype(jnp.bfloat16)
    b_vec = jnp.pad(bias.astype(jnp.float32), (0, cp - c)).reshape(1, cp)

    out = pl.pallas_call(
        _resblock_kernel,
        grid=(n, num_t),
        in_specs=[
            pl.BlockSpec((1, tile_h, wp, cp), lambda i, j: (i, j, 0, 0)),
            pl.BlockSpec((1, 2, wp, cp),
                         lambda i, j: (i, (j + 1) * (tile_h // 2), 0, 0)),
            pl.BlockSpec((3, 3 * cp, cp), lambda i, j: (0, 0, 0)),   # resident
            pl.BlockSpec((1, cp), lambda i, j: (0, 0)),              # resident
        ],
        out_specs=pl.BlockSpec((1, m_blk, cp), lambda i, j: (i, j, 0)),
        out_shape=jax.ShapeDtypeStruct((n, h2 * w, cp), jnp.bfloat16),
        compiler_params=pltpu.CompilerParams(
            dimension_semantics=("parallel", "parallel"),
            vmem_limit_bytes=vmem_limit),
        cost_estimate=pl.CostEstimate(
            flops=18 * n * h2 * w * cp * cp,
            transcendentals=2 * n * h2 * w * cp,
            bytes_accessed=(n * (h2 + 2 * num_t) * wp * cp * 2      # input + halos
                            + 9 * cp * cp * 2 + cp * 4              # weights + bias
                            + n * h2 * w * cp * 2)),                # bf16 output
    )(x_pad, x_pad, w3, b_vec)

    out_nhwc = out.reshape(n, h2, w, cp)[:, :h, :, :c]
    return jnp.transpose(out_nhwc, (0, 3, 1, 2)).astype(x_nchw.dtype)


def _reference(x_nchw, w_oihw, bias):
    """Plain-JAX f32 reference: silu(conv2d(x, w, b, padding=1) + x)."""
    y = lax.conv_general_dilated(
        x_nchw, w_oihw, window_strides=(1, 1), padding="SAME",
        dimension_numbers=("NCHW", "OIHW", "NCHW"))
    y = y + bias[None, :, None, None] + x_nchw
    return y * jax.nn.sigmoid(y)


if __name__ == "__main__":
    key = jax.random.PRNGKey(0)
    k_x, k_w, k_b = jax.random.split(key, 3)

    N, C, H, W = 2, 4, 16, 16
    x = jax.random.normal(k_x, (N, C, H, W), dtype=jnp.float32)
    # deterministic synthetic Conv2d(C, C, 3, padding=1) parameters
    w = 0.1 * jax.random.normal(k_w, (C, C, 3, 3), dtype=jnp.float32)
    b = 0.1 * jax.random.normal(k_b, (C,), dtype=jnp.float32)

    out = jax.block_until_ready(resblock_alt(x, w, b))
    ref = jax.block_until_ready(_reference(x, w, b))

    assert out.shape == (N, C, H, W)
    # bf16 input/weights/output + approx-reciprocal sigmoid => relaxed tolerance.
    assert jnp.allclose(out, ref, atol=3e-2, rtol=3e-2), "mismatch vs reference"

    print("KERNEL_OK")
</pallas_src>

<mosaic_0001>
module attributes {stable_mosaic.version = 11 : i64} {
  func.func @_resblock_kernel(%arg0: i32, %arg1: i32, %arg2: memref<1x16x18x128xbf16, #tpu.memory_space<vmem>>, %arg3: memref<1x2x18x128xbf16, #tpu.memory_space<vmem>>, %arg4: memref<3x384x128xbf16, #tpu.memory_space<vmem>>, %arg5: memref<1x128xf32, #tpu.memory_space<vmem>>, %arg6: memref<1x256x128xbf16, #tpu.memory_space<vmem>>) attributes {dimension_semantics = [#tpu.dimension_semantics<parallel>, #tpu.dimension_semantics<parallel>], iteration_bounds = array<i64: 2, 1>, scalar_prefetch = 0 : i64, scratch_operands = 0 : i64, tpu.core_type = #tpu.core_type<tc>, window_params = [{transform_indices = @transform_0, window_bounds = array<i64: 1, 16, 18, 128>}, {transform_indices = @transform_1, window_bounds = array<i64: 1, 2, 18, 128>}, {pipeline_mode = #tpu.pipeline_mode<synchronous>, transform_indices = @transform_2, window_bounds = array<i64: 3, 384, 128>}, {pipeline_mode = #tpu.pipeline_mode<synchronous>, transform_indices = @transform_3, window_bounds = array<i64: 1, 128>}, {transform_indices = @transform_4, window_bounds = array<i64: 1, 256, 128>}]} {
    %c0 = arith.constant 0 : index
    %c0_0 = arith.constant 0 : index
    %c0_1 = arith.constant 0 : index
    %c0_2 = arith.constant 0 : index
    %0 = vector.load %arg2[%c0, %c0_0, %c0_1, %c0_2] : memref<1x16x18x128xbf16, #tpu.memory_space<vmem>>, vector<1x16x18x128xbf16>
    %1 = vector.shape_cast %0 : vector<1x16x18x128xbf16> to vector<16x18x128xbf16>
    %c0_3 = arith.constant 0 : index
    %c0_4 = arith.constant 0 : index
    %c0_5 = arith.constant 0 : index
    %c0_6 = arith.constant 0 : index
    %2 = vector.load %arg3[%c0_3, %c0_4, %c0_5, %c0_6] : memref<1x2x18x128xbf16, #tpu.memory_space<vmem>>, vector<1x2x18x128xbf16>
    %3 = vector.shape_cast %2 : vector<1x2x18x128xbf16> to vector<2x18x128xbf16>
    %4 = tpu.concatenate %1, %3 in 0 : vector<16x18x128xbf16>, vector<2x18x128xbf16> -> vector<18x18x128xbf16>
    %5 = vector.extract_strided_slice %4 {offsets = [0, 0, 0], sizes = [16, 18, 128], strides = [1, 1, 1]} : vector<18x18x128xbf16> to vector<16x18x128xbf16>
    %6 = vector.extract_strided_slice %4 {offsets = [1, 0, 0], sizes = [16, 18, 128], strides = [1, 1, 1]} : vector<18x18x128xbf16> to vector<16x18x128xbf16>
    %7 = vector.extract_strided_slice %4 {offsets = [2, 0, 0], sizes = [16, 18, 128], strides = [1, 1, 1]} : vector<18x18x128xbf16> to vector<16x18x128xbf16>
    %8 = tpu.concatenate %5, %6, %7 in 2 : vector<16x18x128xbf16>, vector<16x18x128xbf16>, vector<16x18x128xbf16> -> vector<16x18x384xbf16>
    %cst = arith.constant 0.000000e+00 : f32
    %9 = vector.broadcast %cst : f32 to vector<256x128xf32>
    %10 = vector.extract_strided_slice %8 {offsets = [0, 0, 0], sizes = [16, 16, 384], strides = [1, 1, 1]} : vector<16x18x384xbf16> to vector<16x16x384xbf16>
    %11 = vector.shape_cast %10 : vector<16x16x384xbf16> to vector<256x384xbf16>
    %c0_7 = arith.constant 0 : index
    %c0_8 = arith.constant 0 : index
    %c0_9 = arith.constant 0 : index
    %12 = vector.load %arg4[%c0_7, %c0_8, %c0_9] : memref<3x384x128xbf16, #tpu.memory_space<vmem>>, vector<1x384x128xbf16>
    %13 = vector.shape_cast %12 : vector<1x384x128xbf16> to vector<384x128xbf16>
    %cst_10 = arith.constant dense<0.000000e+00> : vector<256x128xf32>
    %14 = tpu.matmul %11, %13, %cst_10 {dimension_numbers = #tpu.dot_dimension_numbers<[1], [0], [0], [1], [0, 0, 1, 1], [], []>} : vector<256x384xbf16>, vector<384x128xbf16>, vector<256x128xf32> -> vector<256x128xf32>
    %15 = arith.addf %9, %14 : vector<256x128xf32>
    %16 = vector.extract_strided_slice %8 {offsets = [0, 1, 0], sizes = [16, 16, 384], strides = [1, 1, 1]} : vector<16x18x384xbf16> to vector<16x16x384xbf16>
    %17 = vector.shape_cast %16 : vector<16x16x384xbf16> to vector<256x384xbf16>
    %c1 = arith.constant 1 : index
    %c0_11 = arith.constant 0 : index
    %c0_12 = arith.constant 0 : index
    %18 = vector.load %arg4[%c1, %c0_11, %c0_12] : memref<3x384x128xbf16, #tpu.memory_space<vmem>>, vector<1x384x128xbf16>
    %19 = vector.shape_cast %18 : vector<1x384x128xbf16> to vector<384x128xbf16>
    %cst_13 = arith.constant dense<0.000000e+00> : vector<256x128xf32>
    %20 = tpu.matmul %17, %19, %cst_13 {dimension_numbers = #tpu.dot_dimension_numbers<[1], [0], [0], [1], [0, 0, 1, 1], [], []>} : vector<256x384xbf16>, vector<384x128xbf16>, vector<256x128xf32> -> vector<256x128xf32>
    %21 = arith.addf %15, %20 : vector<256x128xf32>
    %22 = vector.extract_strided_slice %8 {offsets = [0, 2, 0], sizes = [16, 16, 384], strides = [1, 1, 1]} : vector<16x18x384xbf16> to vector<16x16x384xbf16>
    %23 = vector.shape_cast %22 : vector<16x16x384xbf16> to vector<256x384xbf16>
    %c2 = arith.constant 2 : index
    %c0_14 = arith.constant 0 : index
    %c0_15 = arith.constant 0 : index
    %24 = vector.load %arg4[%c2, %c0_14, %c0_15] : memref<3x384x128xbf16, #tpu.memory_space<vmem>>, vector<1x384x128xbf16>
    %25 = vector.shape_cast %24 : vector<1x384x128xbf16> to vector<384x128xbf16>
    %cst_16 = arith.constant dense<0.000000e+00> : vector<256x128xf32>
    %26 = tpu.matmul %23, %25, %cst_16 {dimension_numbers = #tpu.dot_dimension_numbers<[1], [0], [0], [1], [0, 0, 1, 1], [], []>} : vector<256x384xbf16>, vector<384x128xbf16>, vector<256x128xf32> -> vector<256x128xf32>
    %27 = arith.addf %21, %26 : vector<256x128xf32>
    %28 = vector.extract_strided_slice %4 {offsets = [1, 1, 0], sizes = [16, 16, 128], strides = [1, 1, 1]} : vector<18x18x128xbf16> to vector<16x16x128xbf16>
    %29 = vector.shape_cast %28 : vector<16x16x128xbf16> to vector<256x128xbf16>
    %30 = arith.extf %29 : vector<256x128xbf16> to vector<256x128xf32>
    %c0_17 = arith.constant 0 : index
    %c0_18 = arith.constant 0 : index
    %31 = vector.load %arg5[%c0_17, %c0_18] : memref<1x128xf32, #tpu.memory_space<vmem>>, vector<1x128xf32>
    %32 = vector.broadcast %31 : vector<1x128xf32> to vector<256x128xf32>
    %33 = arith.addf %27, %32 : vector<256x128xf32>
    %34 = arith.addf %33, %30 : vector<256x128xf32>
    %cst_19 = arith.constant 0.000000e+00 : f32
    %35 = vector.broadcast %cst_19 : f32 to vector<256x128xf32>
    %36 = arith.subf %35, %34 : vector<256x128xf32>
    %cst_20 = arith.constant 3.000000e+01 : f32
    %37 = vector.broadcast %cst_20 : f32 to vector<256x128xf32>
    %38 = arith.minimumf %36, %37 : vector<256x128xf32>
    %39 = math.exp %38 : vector<256x128xf32>
    %cst_21 = arith.constant 1.000000e+00 : f32
    %40 = vector.broadcast %cst_21 : f32 to vector<256x128xf32>
    %41 = arith.addf %40, %39 : vector<256x128xf32>
    %42 = tpu.reciprocal %41 {approx = true} : vector<256x128xf32> -> vector<256x128xf32>
    %43 = arith.mulf %34, %42 : vector<256x128xf32>
    %44 = arith.truncf %43 : vector<256x128xf32> to vector<256x128xbf16>
    %c0_22 = arith.constant 0 : index
    %c0_23 = arith.constant 0 : index
    %c0_24 = arith.constant 0 : index
    %45 = vector.load %arg6[%c0_22, %c0_23, %c0_24] : memref<1x256x128xbf16, #tpu.memory_space<vmem>>, vector<1x256x128xbf16>
    %46 = vector.shape_cast %45 : vector<1x256x128xbf16> to vector<256x128xbf16>
    %47 = vector.shape_cast %44 : vector<256x128xbf16> to vector<1x256x128xbf16>
    tpu.vector_store %arg6[%c0_22, %c0_23, %c0_24], %47 {strides = array<i32>} : memref<1x256x128xbf16, #tpu.memory_space<vmem>>, vector<1x256x128xbf16>,
    return
  }
  func.func @transform_0(%arg0: i32, %arg1: i32) -> (i32, i32, i32, i32) {
    %c0_i32 = arith.constant 0 : i32
    %c0_i32_0 = arith.constant 0 : i32
    %c0_i32_1 = arith.constant 0 : i32
    return %arg0, %arg1, %c0_i32, %c0_i32_0 : i32, i32, i32, i32
  }
  func.func @transform_1(%arg0: i32, %arg1: i32) -> (i32, i32, i32, i32) {
    %c1_i32 = arith.constant 1 : i32
    %0 = arith.addi %arg1, %c1_i32 : i32
    %c8_i32 = arith.constant 8 : i32
    %1 = arith.muli %0, %c8_i32 : i32
    %c0_i32 = arith.constant 0 : i32
    %c0_i32_0 = arith.constant 0 : i32
    %c0_i32_1 = arith.constant 0 : i32
    return %arg0, %1, %c0_i32, %c0_i32_0 : i32, i32, i32, i32
  }
  func.func @transform_2(%arg0: i32, %arg1: i32) -> (i32, i32, i32) {
    %c0_i32 = arith.constant 0 : i32
    %c0_i32_0 = arith.constant 0 : i32
    %c0_i32_1 = arith.constant 0 : i32
    %c0_i32_2 = arith.constant 0 : i32
    return %c0_i32, %c0_i32_0, %c0_i32_1 : i32, i32, i32
  }
  func.func @transform_3(%arg0: i32, %arg1: i32) -> (i32, i32) {
    %c0_i32 = arith.constant 0 : i32
    %c0_i32_0 = arith.constant 0 : i32
    %c0_i32_1 = arith.constant 0 : i32
    return %c0_i32, %c0_i32_0 : i32, i32
  }
  func.func @transform_4(%arg0: i32, %arg1: i32) -> (i32, i32, i32) {
    %c0_i32 = arith.constant 0 : i32
    %c0_i32_0 = arith.constant 0 : i32
    return %arg0, %arg1, %c0_i32 : i32, i32, i32
  }
}

</mosaic_0001>

<llo_original>
// kernel: resblock_alt.1
$region0: #{resblock_alt.1}
  #allocation0 [shape = 'u32[]', space=smem, size = 0x4, offset = 0x4, fixed_abs, tag = 'smem constant byte address 0x4 - core index']
  #allocation1 [shape = 'u32[144,128]{1,0:T(1,128)}', space=vmem, size = 0x12000, scoped, tag = 'internal scratch']
  %s0 = inlined_call_operand.vmem [shape: bf16[2,32,18,128], index: 0, kind: input, shape index: {}, may-alias: {0,1}]
  %s1 = inlined_call_operand.vmem [shape: bf16[2,32,18,128], index: 1, kind: input, shape index: {}, may-alias: {0,1}]
  %s2 = inlined_call_operand.vmem [shape: bf16[3,384,128], index: 2, kind: input, shape index: {}]
  %s3 = inlined_call_operand.vmem [shape: f32[1,128], index: 3, kind: input, shape index: {}]
  %s4 = inlined_call_operand.vmem [shape: bf16[2,256,128], index: 4, kind: output, shape index: {}]
  %s5 = sld [smem:[#allocation0]]
  $region49: #{resblock_alt.1} parent=0
    _
  %s7 = ssub.s32 1, %s5
  %s8 = scalar_select 0, %s7, %s5
  loop: start=0, step=1, limit=4
  $region2: #{resblock_alt.1} parent=0 // loop_pre_header
    _
  $region3: #{resblock_alt.1} parent=0 // loop_header
    %s10 = sphi 0, %s14
    %p11 = scmp.ge.s32.totalorder %s10, 4
    %s17 = sphi 0, %s29
    %s18 = sphi 0, %s25
    %s19 = sphi 0, %s17
    %s20 = sphi 0, %s18
    %s21 = sphi 0, %s19
    %s22 = sphi 0, %s20
    %s34 = sphi 0, %s36
    %s37 = sphi 0, %s34
    %s38 = sphi 0, %s37
    %s54 = sphi 0, %s38
    %s66 = sphi 0, %s68
    %s69 = sphi 0, %s66
    %s70 = sphi 0, %s69
    %s86 = sphi 0, %s70
    %s90 = sphi 0, %s90
    %s92 = sphi 0, %s90
    %s93 = sphi 0, %s92
    %s107 = sphi 0, %s93
    %s111 = sphi 0, %s111
    %s113 = sphi 0, %s111
    %s114 = sphi 0, %s113
    %s128 = sphi 0, %s114
    %s136 = sphi 0, %s138
    %s139 = sphi 0, %s136
    %s140 = sphi 0, %s139
    %s156 = sphi 0, %s140
  $region4: #{resblock_alt.1} parent=0 // loop_header_branch
    %13 = sbr.rel (%p11) target = $region8
  $region5: #{resblock_alt.1} parent=0 // loop_body
    %s15 = ssub.s32 %s10, 1
    %s16 = ssub.s32 %s10, 2
    %s23 = sadd.s32 1, %s18
    %p24 = scmp.ge.s32.totalorder %s23, 1
    %s25 = scalar_select %p24, 0, %s23
    %s26 = sadd.s32 1, %s17
    %s27 = scalar_select %p24, %s26, %s17
    %p28 = scmp.ge.s32.totalorder %s27, 2
    %s29 = scalar_select %p28, 0, %s27
    %s30 = ssub.s32 %s17, %s29
    %s31 = ssub.s32 %s18, %s25
    %s32 = sor.u32 %s30, %s31
    %p33 = scmp.eq.s32.totalorder %s32, 0
    %s35 = sadd.s32 %s34, 1
    %s36 = scalar_select %p33, %s34, %s35
    %p39 = pneg %p33
    %p40 = scmp.eq.s32.totalorder %s10, 1
    %p41 = por %p39, %p40
    %p42 = scmp.ne.s32.totalorder %s34, %s37
    %p43 = scmp.eq.s32.totalorder %s10, 0
    %p44 = por %p42, %p43
    %p45 = scmp.ne.s32.totalorder %s34, %s37
    %p46 = scmp.eq.s32.totalorder %s15, 1
    %p47 = por %p45, %p46
    %p48 = scmp.ne.s32.totalorder %s37, %s38
    %p49 = scmp.eq.s32.totalorder %s15, 0
    %p50 = por %p48, %p49
    %p51 = scmp.ne.s32.totalorder %s37, %s38
    %p52 = scmp.eq.s32.totalorder %s16, 1
    %p53 = por %p51, %p52
    %p55 = scmp.ne.s32.totalorder %s38, %s54
    %p56 = scmp.eq.s32.totalorder %s16, 0
    %p57 = por %p55, %p56
    %s58 = sadd.s32 %s18, 1
    %s59 = smul.u32 %s58, 8
    %s60 = sadd.s32 %s25, 1
    %s61 = smul.u32 %s60, 8
    %s62 = ssub.s32 %s17, %s29
    %s63 = ssub.s32 %s59, %s61
    %s64 = sor.u32 %s62, %s63
    %p65 = scmp.eq.s32.totalorder %s64, 0
    %s67 = sadd.s32 %s66, 1
    %s68 = scalar_select %p65, %s66, %s67
    %p71 = pneg %p65
    %p72 = scmp.eq.s32.totalorder %s10, 1
    %p73 = por %p71, %p72
    %p74 = scmp.ne.s32.totalorder %s66, %s69
    %p75 = scmp.eq.s32.totalorder %s10, 0
    %p76 = por %p74, %p75
    %p77 = scmp.ne.s32.totalorder %s66, %s69
    %p78 = scmp.eq.s32.totalorder %s15, 1
    %p79 = por %p77, %p78
    %p80 = scmp.ne.s32.totalorder %s69, %s70
    %p81 = scmp.eq.s32.totalorder %s15, 0
    %p82 = por %p80, %p81
    %p83 = scmp.ne.s32.totalorder %s69, %s70
    %p84 = scmp.eq.s32.totalorder %s16, 1
    %p85 = por %p83, %p84
    %p87 = scmp.ne.s32.totalorder %s70, %s86
    %p88 = scmp.eq.s32.totalorder %s16, 0
    %p89 = por %p87, %p88
    %s91 = sadd.s32 %s90, 1
    %p94 = scmp.eq.s32.totalorder %s10, 1
    %p95 = scmp.ne.s32.totalorder %s90, %s92
    %p96 = scmp.eq.s32.totalorder %s10, 0
    %p97 = por %p95, %p96
    %p98 = scmp.ne.s32.totalorder %s90, %s92
    %p99 = scmp.eq.s32.totalorder %s15, 1
    %p100 = por %p98, %p99
    %p101 = scmp.ne.s32.totalorder %s92, %s93
    %p102 = scmp.eq.s32.totalorder %s15, 0
    %p103 = por %p101, %p102
    %p104 = scmp.ne.s32.totalorder %s92, %s93
    %p105 = scmp.eq.s32.totalorder %s16, 1
    %p106 = por %p104, %p105
    %p108 = scmp.ne.s32.totalorder %s93, %s107
    %p109 = scmp.eq.s32.totalorder %s16, 0
    %p110 = por %p108, %p109
    %s112 = sadd.s32 %s111, 1
    %p115 = scmp.eq.s32.totalorder %s10, 1
    %p116 = scmp.ne.s32.totalorder %s111, %s113
    %p117 = scmp.eq.s32.totalorder %s10, 0
    %p118 = por %p116, %p117
    %p119 = scmp.ne.s32.totalorder %s111, %s113
    %p120 = scmp.eq.s32.totalorder %s15, 1
    %p121 = por %p119, %p120
    %p122 = scmp.ne.s32.totalorder %s113, %s114
    %p123 = scmp.eq.s32.totalorder %s15, 0
    %p124 = por %p122, %p123
    %p125 = scmp.ne.s32.totalorder %s113, %s114
    %p126 = scmp.eq.s32.totalorder %s16, 1
    %p127 = por %p125, %p126
    %p129 = scmp.ne.s32.totalorder %s114, %s128
    %p130 = scmp.eq.s32.totalorder %s16, 0
    %p131 = por %p129, %p130
    %s132 = ssub.s32 %s17, %s29
    %s133 = ssub.s32 %s18, %s25
    %s134 = sor.u32 %s132, %s133
    %p135 = scmp.eq.s32.totalorder %s134, 0
    %s137 = sadd.s32 %s136, 1
    %s138 = scalar_select %p135, %s136, %s137
    %p141 = pneg %p135
    %p142 = scmp.eq.s32.totalorder %s10, 1
    %p143 = por %p141, %p142
    %p144 = scmp.ne.s32.totalorder %s136, %s139
    %p145 = scmp.eq.s32.totalorder %s10, 0
    %p146 = por %p144, %p145
    %p147 = scmp.ne.s32.totalorder %s136, %s139
    %p148 = scmp.eq.s32.totalorder %s15, 1
    %p149 = por %p147, %p148
    %p150 = scmp.ne.s32.totalorder %s139, %s140
    %p151 = scmp.eq.s32.totalorder %s15, 0
    %p152 = por %p150, %p151
    %p153 = scmp.ne.s32.totalorder %s139, %s140
    %p154 = scmp.eq.s32.totalorder %s16, 1
    %p155 = por %p153, %p154
    %p157 = scmp.ne.s32.totalorder %s140, %s156
    %p158 = scmp.eq.s32.totalorder %s16, 0
    %p159 = por %p157, %p158
    %p160 = scmp.le.s32.totalorder 1, %s10
    %p161 = scmp.lt.s32.totalorder %s10, 3
    %p162 = pnand %p160, %p161
    %p163 = pneg %p162
    // Predicated region
    $region9: #{resblock_alt.1} parent=5 // pred_check
      _
    $region10: #{resblock_alt.1} parent=5 // pred_check_branch
      %165 = sbr.rel (%p162) target = $region12
    $region11: #{resblock_alt.1} parent=5 // pred_region
      %s166 = ssub.s32 %s10, 1
      // Predicated region
      $region13: #{resblock_alt.1} parent=11 // pred_check
        %p167 = pneg %p103
      $region14: #{resblock_alt.1} parent=11 // pred_check_branch
        %169 = sbr.rel (%p167) target = $region16
      $region15: #{resblock_alt.1} parent=11 // pred_region
        _
      $region16: #{resblock_alt.1} parent=11 // pred_fallthru
        _
      // Predicated region
      $region17: #{resblock_alt.1} parent=11 // pred_check
        %p170 = pneg %p124
      $region18: #{resblock_alt.1} parent=11 // pred_check_branch
        %172 = sbr.rel (%p170) target = $region20
      $region19: #{resblock_alt.1} parent=11 // pred_region
        _
      $region20: #{resblock_alt.1} parent=11 // pred_fallthru
        _
    $region12: #{resblock_alt.1} parent=5 // pred_fallthru
      _
    %p173 = scmp.lt.s32.totalorder %s10, 2
    // Predicated region
    $region21: #{resblock_alt.1} parent=5 // pred_check
      %p174 = pneg %p173
    $region22: #{resblock_alt.1} parent=5 // pred_check_branch
      %176 = sbr.rel (%p174) target = $region24
    $region23: #{resblock_alt.1} parent=5 // pred_region
      // Predicated region
      $region25: #{resblock_alt.1} parent=23 // pred_check
        %p177 = pneg %p44
      $region26: #{resblock_alt.1} parent=23 // pred_check_branch
        %179 = sbr.rel (%p177) target = $region28
      $region27: #{resblock_alt.1} parent=23 // pred_region
        %s180 = smul.u32 16, %s18
        %p181 = scmp.lt.s32.totalorder %s17, 1
        %s182 = scalar_select %p181, %s17, 1
        %p183 = scmp.lt.s32.totalorder %s180, 31
        %s184 = scalar_select %p183, %s180, 31
        %s185 = smul.addr %s184, 3
        %s186 = smul.addr %s182, 96
        %s187 = sadd.s32 %s185, %s186
        %s188 = smul.addr %s187, 4
        %s189 = scalar_lea.vmem %s0, %s188
        %s190 = smul.u32 16, %s18
      $region28: #{resblock_alt.1} parent=23 // pred_fallthru
        _
      // Predicated region
      $region29: #{resblock_alt.1} parent=23 // pred_check
        %p191 = pneg %p76
      $region30: #{resblock_alt.1} parent=23 // pred_check_branch
        %193 = sbr.rel (%p191) target = $region32
      $region31: #{resblock_alt.1} parent=23 // pred_region
        %s194 = sadd.s32 %s18, 1
        %s195 = smul.u32 %s194, 8
        %s196 = smul.u32 2, %s195
        %p197 = scmp.lt.s32.totalorder %s17, 1
        %s198 = scalar_select %p197, %s17, 1
        %p199 = scmp.lt.s32.totalorder %s196, 31
        %s200 = scalar_select %p199, %s196, 31
        %s201 = smul.addr %s200, 3
        %s202 = smul.addr %s198, 96
        %s203 = sadd.s32 %s201, %s202
        %s204 = smul.addr %s203, 4
        %s205 = scalar_lea.vmem %s1, %s204
        %s206 = sadd.s32 %s18, 1
        %s207 = smul.u32 %s206, 8
        %s208 = smul.u32 2, %s207
      $region32: #{resblock_alt.1} parent=23 // pred_fallthru
        _
    $region24: #{resblock_alt.1} parent=5 // pred_fallthru
      _
    %p209 = scmp.le.s32.totalorder 1, %s10
    %p210 = scmp.lt.s32.totalorder %s10, 3
    %p211 = pnand %p209, %p210
    %p212 = pneg %p211
    // Predicated region
    $region33: #{resblock_alt.1} parent=5 // pred_check
      _
    $region34: #{resblock_alt.1} parent=5 // pred_check_branch
      %214 = sbr.rel (%p211) target = $region36
    $region35: #{resblock_alt.1} parent=5 // pred_region
      %s215 = ssub.s32 %s10, 1
      %s216 = smul.u32 16, %s20
      %p217 = scmp.lt.s32.totalorder %s19, 1
      %s218 = scalar_select %p217, %s19, 1
      %p219 = scmp.lt.s32.totalorder %s216, 31
      %s220 = scalar_select %p219, %s216, 31
      %s221 = smul.addr %s220, 3
      %s222 = smul.addr %s218, 96
      %s223 = sadd.s32 %s221, %s222
      %s224 = smul.addr %s223, 4
      %s225 = scalar_lea.vmem %s0, %s224
      %p226 = pneg %p50
      %p227 = pneg %p47
      %s228 = sadd.s32 %s20, 1
      %s229 = smul.u32 %s228, 8
      %s230 = smul.u32 2, %s229
      %p231 = scmp.lt.s32.totalorder %s19, 1
      %s232 = scalar_select %p231, %s19, 1
      %p233 = scmp.lt.s32.totalorder %s230, 31
      %s234 = scalar_select %p233, %s230, 31
      %s235 = smul.addr %s234, 3
      %s236 = smul.addr %s232, 96
      %s237 = sadd.s32 %s235, %s236
      %s238 = smul.addr %s237, 4
      %s239 = scalar_lea.vmem %s1, %s238
      %p240 = pneg %p82
      %p241 = pneg %p79
      %p242 = pneg %p103
      %p243 = pneg %p100
      %p244 = pneg %p124
      %p245 = pneg %p121
      %p246 = pneg %p152
      %p247 = pneg %p149
      %s248 = smul.u32 32, %s20
      %p249 = scmp.lt.s32.totalorder %s19, 1
      %s250 = scalar_select %p249, %s19, 1
      %p251 = scmp.lt.s32.totalorder %s248, 31
      %s252 = scalar_select %p251, %s248, 31
      %s253 = smul.addr %s250, 32
      %s254 = sadd.s32 %s252, %s253
      %s255 = smul.addr %s254, 4
      %s256 = scalar_lea.vmem %s4, %s255
      %s257 = smul.u32 16, %s20
      %p258 = scmp.lt.s32.totalorder %s19, 1
      %s259 = scalar_select %p258, %s19, 1
      %p260 = scmp.lt.s32.totalorder %s257, 31
      %s261 = scalar_select %p260, %s257, 31
      %s262 = smul.addr %s261, 3
      %s263 = smul.addr %s259, 96
      %s264 = sadd.s32 %s262, %s263
      %s265 = smul.addr %s264, 4
      %s266 = scalar_lea.vmem %s0, %s265
      %s267 = smul.u32 16, %s20
      %s268 = sadd.s32 %s20, 1
      %s269 = smul.u32 %s268, 8
      %s270 = smul.u32 2, %s269
      %p271 = scmp.lt.s32.totalorder %s19, 1
      %s272 = scalar_select %p271, %s19, 1
      %p273 = scmp.lt.s32.totalorder %s270, 31
      %s274 = scalar_select %p273, %s270, 31
      %s275 = smul.addr %s274, 3
      %s276 = smul.addr %s272, 96
      %s277 = sadd.s32 %s275, %s276
      %s278 = smul.addr %s277, 4
      %s279 = scalar_lea.vmem %s1, %s278
      %s280 = sadd.s32 %s20, 1
      %s281 = smul.u32 %s280, 8
      %s282 = smul.u32 2, %s281
      %s283 = smul.u32 32, %s20
      %p284 = scmp.lt.s32.totalorder %s19, 1
      %s285 = scalar_select %p284, %s19, 1
      %p286 = scmp.lt.s32.totalorder %s283, 31
      %s287 = scalar_select %p286, %s283, 31
      %s288 = smul.addr %s285, 32
      %s289 = sadd.s32 %s287, %s288
      %s290 = smul.addr %s289, 4
      %s291 = scalar_lea.vmem %s4, %s290
      %s292 = smul.u32 32, %s20
      %v294 = vld [vmem:[%s266] sm:$0xf]
      %v295 = vld [vmem:[%s266 + $0x4] sm:$0xf]
      %v296 = vld [vmem:[%s266 + $0x8] sm:$0x1]
      %v297 = vld [vmem:[%s266 + $0xc] sm:$0xf]
      %v298 = vld [vmem:[%s266 + $0x10] sm:$0xf]
      %v299 = vld [vmem:[%s266 + $0x14] sm:$0x1]
      %v300 = vld [vmem:[%s266 + $0x18] sm:$0xf]
      %v301 = vld [vmem:[%s266 + $0x1c] sm:$0xf]
      %v302 = vld [vmem:[%s266 + $0x20] sm:$0x1]
      %v303 = vld [vmem:[%s266 + $0x24] sm:$0xf]
      %v304 = vld [vmem:[%s266 + $0x28] sm:$0xf]
      %v305 = vld [vmem:[%s266 + $0x2c] sm:$0x1]
      %v306 = vld [vmem:[%s266 + $0x30] sm:$0xf]
      %v307 = vld [vmem:[%s266 + $0x34] sm:$0xf]
      %v308 = vld [vmem:[%s266 + $0x38] sm:$0x1]
      %v309 = vld [vmem:[%s266 + $0x3c] sm:$0xf]
      %v310 = vld [vmem:[%s266 + $0x40] sm:$0xf]
      %v311 = vld [vmem:[%s266 + $0x44] sm:$0x1]
      %v312 = vld [vmem:[%s266 + $0x48] sm:$0xf]
      %v313 = vld [vmem:[%s266 + $0x4c] sm:$0xf]
      %v314 = vld [vmem:[%s266 + $0x50] sm:$0x1]
      %v315 = vld [vmem:[%s266 + $0x54] sm:$0xf]
      %v316 = vld [vmem:[%s266 + $0x58] sm:$0xf]
      %v317 = vld [vmem:[%s266 + $0x5c] sm:$0x1]
      %v318 = vld [vmem:[%s266 + $0x60] sm:$0xf]
      %v319 = vld [vmem:[%s266 + $0x64] sm:$0xf]
      %v320 = vld [vmem:[%s266 + $0x68] sm:$0x1]
      %v321 = vld [vmem:[%s266 + $0x6c] sm:$0xf]
      %v322 = vld [vmem:[%s266 + $0x70] sm:$0xf]
      %v323 = vld [vmem:[%s266 + $0x74] sm:$0x1]
      %v324 = vld [vmem:[%s266 + $0x78] sm:$0xf]
      %v325 = vld [vmem:[%s266 + $0x7c] sm:$0xf]
      %v326 = vld [vmem:[%s266 + $0x80] sm:$0x1]
      %v327 = vld [vmem:[%s266 + $0x84] sm:$0xf]
      %v328 = vld [vmem:[%s266 + $0x88] sm:$0xf]
      %v329 = vld [vmem:[%s266 + $0x8c] sm:$0x1]
      %v330 = vld [vmem:[%s266 + $0x90] sm:$0xf]
      %v331 = vld [vmem:[%s266 + $0x94] sm:$0xf]
      %v332 = vld [vmem:[%s266 + $0x98] sm:$0x1]
      %v333 = vld [vmem:[%s266 + $0x9c] sm:$0xf]
      %v334 = vld [vmem:[%s266 + $0xa0] sm:$0xf]
      %v335 = vld [vmem:[%s266 + $0xa4] sm:$0x1]
      %v336 = vld [vmem:[%s266 + $0xa8] sm:$0xf]
      %v337 = vld [vmem:[%s266 + $0xac] sm:$0xf]
      %v338 = vld [vmem:[%s266 + $0xb0] sm:$0x1]
      %v339 = vld [vmem:[%s266 + $0xb4] sm:$0xf]
      %v340 = vld [vmem:[%s266 + $0xb8] sm:$0xf]
      %v341 = vld [vmem:[%s266 + $0xbc] sm:$0x1]
      %v342 = vld [vmem:[%s279] sm:$0xf]
      %v343 = vld [vmem:[%s279 + $0x4] sm:$0xf]
      %v344 = vld [vmem:[%s279 + $0x8] sm:$0x1]
      %v345 = vld [vmem:[%s279 + $0xc] sm:$0xf]
      %v346 = vld [vmem:[%s279 + $0x10] sm:$0xf]
      %v347 = vld [vmem:[%s279 + $0x14] sm:$0x1]
      %v396 = vunpack.c.l.b16 %v294
      %v397 = vunpack.c.l.b16 %v295
      %v398 = vunpack.c.l.b16 %v296
      %v399 = vunpack.c.l.b16 %v297
      %v400 = vunpack.c.l.b16 %v298
      %v401 = vunpack.c.l.b16 %v299
      %v402 = vunpack.c.l.b16 %v300
      %v403 = vunpack.c.l.b16 %v301
      %v404 = vunpack.c.l.b16 %v302
      %v405 = vunpack.c.l.b16 %v303
      %v406 = vunpack.c.l.b16 %v304
      %v407 = vunpack.c.l.b16 %v305
      %v408 = vunpack.c.l.b16 %v306
      %v409 = vunpack.c.l.b16 %v307
      %v410 = vunpack.c.l.b16 %v308
      %v411 = vunpack.c.l.b16 %v309
      %v412 = vunpack.c.l.b16 %v310
      %v413 = vunpack.c.l.b16 %v311
      %v414 = vunpack.c.l.b16 %v312
      %v415 = vunpack.c.l.b16 %v313
      %v416 = vunpack.c.l.b16 %v314
      %v417 = vunpack.c.l.b16 %v315
      %v418 = vunpack.c.l.b16 %v316
      %v419 = vunpack.c.l.b16 %v317
      %v420 = vunpack.c.l.b16 %v318
      %v421 = vunpack.c.l.b16 %v319
      %v422 = vunpack.c.l.b16 %v320
      %v423 = vunpack.c.l.b16 %v321
      %v424 = vunpack.c.l.b16 %v322
      %v425 = vunpack.c.l.b16 %v323
      %v426 = vunpack.c.l.b16 %v324
      %v427 = vunpack.c.l.b16 %v325
      %v428 = vunpack.c.l.b16 %v326
      %v429 = vunpack.c.l.b16 %v327
      %v430 = vunpack.c.l.b16 %v328
      %v431 = vunpack.c.l.b16 %v329
      %v432 = vunpack.c.l.b16 %v330
      %v433 = vunpack.c.l.b16 %v331
      %v434 = vunpack.c.l.b16 %v332
      %v435 = vunpack.c.l.b16 %v333
      %v436 = vunpack.c.l.b16 %v334
      %v437 = vunpack.c.l.b16 %v335
      %v438 = vunpack.c.l.b16 %v336
      %v439 = vunpack.c.l.b16 %v337
      %v440 = vunpack.c.l.b16 %v338
      %v441 = vunpack.c.l.b16 %v339
      %v442 = vunpack.c.l.b16 %v340
      %v443 = vunpack.c.l.b16 %v341
      %v444 = vpack.c.b16 %v397, %v396
      %v445 = vpack.c.b16 %v398, %v398
      %v446 = vpack.c.b16 %v400, %v399
      %v447 = vpack.c.b16 %v401, %v401
      %v448 = vpack.c.b16 %v403, %v402
      %v449 = vpack.c.b16 %v404, %v404
      %v450 = vpack.c.b16 %v406, %v405
      %v451 = vpack.c.b16 %v407, %v407
      %v452 = vpack.c.b16 %v409, %v408
      %v453 = vpack.c.b16 %v410, %v410
      %v454 = vpack.c.b16 %v412, %v411
      %v455 = vpack.c.b16 %v413, %v413
      %v456 = vpack.c.b16 %v415, %v414
      %v457 = vpack.c.b16 %v416, %v416
      %v458 = vpack.c.b16 %v418, %v417
      %v459 = vpack.c.b16 %v419, %v419
      %v460 = vpack.c.b16 %v421, %v420
      %v461 = vpack.c.b16 %v422, %v422
      %v462 = vpack.c.b16 %v424, %v423
      %v463 = vpack.c.b16 %v425, %v425
      %v464 = vpack.c.b16 %v427, %v426
      %v465 = vpack.c.b16 %v428, %v428
      %v466 = vpack.c.b16 %v430, %v429
      %v467 = vpack.c.b16 %v431, %v431
      %v468 = vpack.c.b16 %v433, %v432
      %v469 = vpack.c.b16 %v434, %v434
      %v470 = vpack.c.b16 %v436, %v435
      %v471 = vpack.c.b16 %v437, %v437
      %v472 = vpack.c.b16 %v439, %v438
      %v473 = vpack.c.b16 %v440, %v440
      %v474 = vpack.c.b16 %v442, %v441
      %v475 = vpack.c.b16 %v443, %v443
      %v495 = vunpack.c.l.b16 %v342
      %v496 = vunpack.c.l.b16 %v343
      %v497 = vunpack.c.l.b16 %v344
      %v498 = vpack.c.b16 %v496, %v495
      %v499 = vpack.c.b16 %v497, %v497
      %v504 = vunpack.c.l.b16 %v345
      %v505 = vunpack.c.l.b16 %v346
      %v506 = vunpack.c.l.b16 %v347
      %v507 = vpack.c.b16 %v505, %v504
      %v508 = vpack.c.b16 %v506, %v506
      %v510 = vld [vmem:[%s2] sm:$0xf]
      %v511 = vld [vmem:[%s2 + $0x4] sm:$0xf]
      %v512 = vld [vmem:[%s2 + $0x8] sm:$0xf]
      %v513 = vld [vmem:[%s2 + $0xc] sm:$0xf]
      %v514 = vld [vmem:[%s2 + $0x10] sm:$0xf]
      %v515 = vld [vmem:[%s2 + $0x14] sm:$0xf]
      %v516 = vld [vmem:[%s2 + $0x18] sm:$0xf]
      %v517 = vld [vmem:[%s2 + $0x1c] sm:$0xf]
      %v518 = vld [vmem:[%s2 + $0x20] sm:$0xf]
      %v519 = vld [vmem:[%s2 + $0x24] sm:$0xf]
      %v520 = vld [vmem:[%s2 + $0x28] sm:$0xf]
      %v521 = vld [vmem:[%s2 + $0x2c] sm:$0xf]
      %v522 = vld [vmem:[%s2 + $0x30] sm:$0xf]
      %v523 = vld [vmem:[%s2 + $0x34] sm:$0xf]
      %v524 = vld [vmem:[%s2 + $0x38] sm:$0xf]
      %v525 = vld [vmem:[%s2 + $0x3c] sm:$0xf]
      %v526 = vld [vmem:[%s2 + $0x40] sm:$0xf]
      %v527 = vld [vmem:[%s2 + $0x44] sm:$0xf]
      %v528 = vld [vmem:[%s2 + $0x48] sm:$0xf]
      %v529 = vld [vmem:[%s2 + $0x4c] sm:$0xf]
      %v530 = vld [vmem:[%s2 + $0x50] sm:$0xf]
      %v531 = vld [vmem:[%s2 + $0x54] sm:$0xf]
      %v532 = vld [vmem:[%s2 + $0x58] sm:$0xf]
      %v533 = vld [vmem:[%s2 + $0x5c] sm:$0xf]
      %v534 = vld [vmem:[%s2 + $0x60] sm:$0xf]
      %v535 = vld [vmem:[%s2 + $0x64] sm:$0xf]
      %v536 = vld [vmem:[%s2 + $0x68] sm:$0xf]
      %v537 = vld [vmem:[%s2 + $0x6c] sm:$0xf]
      %v538 = vld [vmem:[%s2 + $0x70] sm:$0xf]
      %v539 = vld [vmem:[%s2 + $0x74] sm:$0xf]
      %v540 = vld [vmem:[%s2 + $0x78] sm:$0xf]
      %v541 = vld [vmem:[%s2 + $0x7c] sm:$0xf]
      %v542 = vld [vmem:[%s2 + $0x80] sm:$0xf]
      %v543 = vld [vmem:[%s2 + $0x84] sm:$0xf]
      %v544 = vld [vmem:[%s2 + $0x88] sm:$0xf]
      %v545 = vld [vmem:[%s2 + $0x8c] sm:$0xf]
      %v546 = vld [vmem:[%s2 + $0x90] sm:$0xf]
      %v547 = vld [vmem:[%s2 + $0x94] sm:$0xf]
      %v548 = vld [vmem:[%s2 + $0x98] sm:$0xf]
      %v549 = vld [vmem:[%s2 + $0x9c] sm:$0xf]
      %v550 = vld [vmem:[%s2 + $0xa0] sm:$0xf]
      %v551 = vld [vmem:[%s2 + $0xa4] sm:$0xf]
      %v552 = vld [vmem:[%s2 + $0xa8] sm:$0xf]
      %v553 = vld [vmem:[%s2 + $0xac] sm:$0xf]
      %v554 = vld [vmem:[%s2 + $0xb0] sm:$0xf]
      %v555 = vld [vmem:[%s2 + $0xb4] sm:$0xf]
      %v556 = vld [vmem:[%s2 + $0xb8] sm:$0xf]
      %v557 = vld [vmem:[%s2 + $0xbc] sm:$0xf]
      %vm558 = vsmask.f32 7424
      %v560 = vshrl.u32 %v444, 16
      %v562 = vshll.u32 %v444, 16
      %v564 = vrot.slane %v562, 1
      %v565 = vor.u32 %v560, %v564
      %v567 = vshll.u32 %v445, 16
      %v569 = vrot.slane %v567, 1
      %v570 = vsel %vm558, %v565, %v569
      %v572 = vshrl.u32 %v446, 16
      %v574 = vshll.u32 %v446, 16
      %v576 = vrot.slane %v574, 1
      %v577 = vor.u32 %v572, %v576
      %v579 = vshll.u32 %v447, 16
      %v581 = vrot.slane %v579, 1
      %v582 = vsel %vm558, %v577, %v581
      %v584 = vshrl.u32 %v448, 16
      %v586 = vshll.u32 %v448, 16
      %v588 = vrot.slane %v586, 1
      %v589 = vor.u32 %v584, %v588
      %v591 = vshll.u32 %v449, 16
      %v593 = vrot.slane %v591, 1
      %v594 = vsel %vm558, %v589, %v593
      %v596 = vshrl.u32 %v450, 16
      %v598 = vshll.u32 %v450, 16
      %v600 = vrot.slane %v598, 1
      %v601 = vor.u32 %v596, %v600
      %v603 = vshll.u32 %v451, 16
      %v605 = vrot.slane %v603, 1
      %v606 = vsel %vm558, %v601, %v605
      %v608 = vshrl.u32 %v452, 16
      %v610 = vshll.u32 %v452, 16
      %v612 = vrot.slane %v610, 1
      %v613 = vor.u32 %v608, %v612
      %v615 = vshll.u32 %v453, 16
      %v617 = vrot.slane %v615, 1
      %v618 = vsel %vm558, %v613, %v617
      %v620 = vshrl.u32 %v454, 16
      %v622 = vshll.u32 %v454, 16
      %v624 = vrot.slane %v622, 1
      %v625 = vor.u32 %v620, %v624
      %v627 = vshll.u32 %v455, 16
      %v629 = vrot.slane %v627, 1
      %v630 = vsel %vm558, %v625, %v629
      %v632 = vshrl.u32 %v456, 16
      %v634 = vshll.u32 %v456, 16
      %v636 = vrot.slane %v634, 1
      %v637 = vor.u32 %v632, %v636
      %v639 = vshll.u32 %v457, 16
      %v641 = vrot.slane %v639, 1
      %v642 = vsel %vm558, %v637, %v641
      %v644 = vshrl.u32 %v458, 16
      %v646 = vshll.u32 %v458, 16
      %v648 = vrot.slane %v646, 1
      %v649 = vor.u32 %v644, %v648
      %v651 = vshll.u32 %v459, 16
      %v653 = vrot.slane %v651, 1
      %v654 = vsel %vm558, %v649, %v653
      %v656 = vshrl.u32 %v460, 16
      %v658 = vshll.u32 %v460, 16
      %v660 = vrot.slane %v658, 1
      %v661 = vor.u32 %v656, %v660
      %v663 = vshll.u32 %v461, 16
      %v665 = vrot.slane %v663, 1
      %v666 = vsel %vm558, %v661, %v665
      %v668 = vshrl.u32 %v462, 16
      %v670 = vshll.u32 %v462, 16
      %v672 = vrot.slane %v670, 1
      %v673 = vor.u32 %v668, %v672
      %v675 = vshll.u32 %v463, 16
      %v677 = vrot.slane %v675, 1
      %v678 = vsel %vm558, %v673, %v677
      %v680 = vshrl.u32 %v464, 16
      %v682 = vshll.u32 %v464, 16
      %v684 = vrot.slane %v682, 1
      %v685 = vor.u32 %v680, %v684
      %v687 = vshll.u32 %v465, 16
      %v689 = vrot.slane %v687, 1
      %v690 = vsel %vm558, %v685, %v689
      %v692 = vshrl.u32 %v466, 16
      %v694 = vshll.u32 %v466, 16
      %v696 = vrot.slane %v694, 1
      %v697 = vor.u32 %v692, %v696
      %v699 = vshll.u32 %v467, 16
      %v701 = vrot.slane %v699, 1
      %v702 = vsel %vm558, %v697, %v701
      %v704 = vshrl.u32 %v468, 16
      %v706 = vshll.u32 %v468, 16
      %v708 = vrot.slane %v706, 1
      %v709 = vor.u32 %v704, %v708
      %v711 = vshll.u32 %v469, 16
      %v713 = vrot.slane %v711, 1
      %v714 = vsel %vm558, %v709, %v713
      %v716 = vshrl.u32 %v470, 16
      %v718 = vshll.u32 %v470, 16
      %v720 = vrot.slane %v718, 1
      %v721 = vor.u32 %v716, %v720
      %v723 = vshll.u32 %v471, 16
      %v725 = vrot.slane %v723, 1
      %v726 = vsel %vm558, %v721, %v725
      %v728 = vshrl.u32 %v472, 16
      %v730 = vshll.u32 %v472, 16
      %v732 = vrot.slane %v730, 1
      %v733 = vor.u32 %v728, %v732
      %v735 = vshll.u32 %v473, 16
      %v737 = vrot.slane %v735, 1
      %v738 = vsel %vm558, %v733, %v737
      %v740 = vshrl.u32 %v474, 16
      %v742 = vshll.u32 %v474, 16
      %v744 = vrot.slane %v742, 1
      %v745 = vor.u32 %v740, %v744
      %v747 = vshll.u32 %v475, 16
      %v749 = vrot.slane %v747, 1
      %v750 = vsel %vm558, %v745, %v749
      %v752 = vshrl.u32 %v498, 16
      %v754 = vshll.u32 %v498, 16
      %v756 = vrot.slane %v754, 1
      %v757 = vor.u32 %v752, %v756
      %v759 = vshll.u32 %v499, 16
      %v761 = vrot.slane %v759, 1
      %v762 = vsel %vm558, %v757, %v761
      %v764 = vshrl.u32 %v507, 16
      %v766 = vshll.u32 %v507, 16
      %v768 = vrot.slane %v766, 1
      %v769 = vor.u32 %v764, %v768
      %v771 = vshll.u32 %v508, 16
      %v773 = vrot.slane %v771, 1
      %v774 = vsel %vm558, %v769, %v773
      %s793 = scalar_lea.vmem %s2, 192
      %v794 = vld [vmem:[%s793] sm:$0xf]
      %v795 = vld [vmem:[%s793 + $0x4] sm:$0xf]
      %v796 = vld [vmem:[%s793 + $0x8] sm:$0xf]
      %v797 = vld [vmem:[%s793 + $0xc] sm:$0xf]
      %v798 = vld [vmem:[%s793 + $0x10] sm:$0xf]
      %v799 = vld [vmem:[%s793 + $0x14] sm:$0xf]
      %v800 = vld [vmem:[%s793 + $0x18] sm:$0xf]
      %v801 = vld [vmem:[%s793 + $0x1c] sm:$0xf]
      %v802 = vld [vmem:[%s793 + $0x20] sm:$0xf]
      %v803 = vld [vmem:[%s793 + $0x24] sm:$0xf]
      %v804 = vld [vmem:[%s793 + $0x28] sm:$0xf]
      %v805 = vld [vmem:[%s793 + $0x2c] sm:$0xf]
      %v806 = vld [vmem:[%s793 + $0x30] sm:$0xf]
      %v807 = vld [vmem:[%s793 + $0x34] sm:$0xf]
      %v808 = vld [vmem:[%s793 + $0x38] sm:$0xf]
      %v809 = vld [vmem:[%s793 + $0x3c] sm:$0xf]
      %v810 = vld [vmem:[%s793 + $0x40] sm:$0xf]
      %v811 = vld [vmem:[%s793 + $0x44] sm:$0xf]
      %v812 = vld [vmem:[%s793 + $0x48] sm:$0xf]
      %v813 = vld [vmem:[%s793 + $0x4c] sm:$0xf]
      %v814 = vld [vmem:[%s793 + $0x50] sm:$0xf]
      %v815 = vld [vmem:[%s793 + $0x54] sm:$0xf]
      %v816 = vld [vmem:[%s793 + $0x58] sm:$0xf]
      %v817 = vld [vmem:[%s793 + $0x5c] sm:$0xf]
      %v818 = vld [vmem:[%s793 + $0x60] sm:$0xf]
      %v819 = vld [vmem:[%s793 + $0x64] sm:$0xf]
      %v820 = vld [vmem:[%s793 + $0x68] sm:$0xf]
      %v821 = vld [vmem:[%s793 + $0x6c] sm:$0xf]
      %v822 = vld [vmem:[%s793 + $0x70] sm:$0xf]
      %v823 = vld [vmem:[%s793 + $0x74] sm:$0xf]
      %v824 = vld [vmem:[%s793 + $0x78] sm:$0xf]
      %v825 = vld [vmem:[%s793 + $0x7c] sm:$0xf]
      %v826 = vld [vmem:[%s793 + $0x80] sm:$0xf]
      %v827 = vld [vmem:[%s793 + $0x84] sm:$0xf]
      %v828 = vld [vmem:[%s793 + $0x88] sm:$0xf]
      %v829 = vld [vmem:[%s793 + $0x8c] sm:$0xf]
      %v830 = vld [vmem:[%s793 + $0x90] sm:$0xf]
      %v831 = vld [vmem:[%s793 + $0x94] sm:$0xf]
      %v832 = vld [vmem:[%s793 + $0x98] sm:$0xf]
      %v833 = vld [vmem:[%s793 + $0x9c] sm:$0xf]
      %v834 = vld [vmem:[%s793 + $0xa0] sm:$0xf]
      %v835 = vld [vmem:[%s793 + $0xa4] sm:$0xf]
      %v836 = vld [vmem:[%s793 + $0xa8] sm:$0xf]
      %v837 = vld [vmem:[%s793 + $0xac] sm:$0xf]
      %v838 = vld [vmem:[%s793 + $0xb0] sm:$0xf]
      %v839 = vld [vmem:[%s793 + $0xb4] sm:$0xf]
      %v840 = vld [vmem:[%s793 + $0xb8] sm:$0xf]
      %v841 = vld [vmem:[%s793 + $0xbc] sm:$0xf]
      %v890 = vunpack.c.l.b16 %v794
      %v891 = vunpack.c.l.b16 %v795
      %v892 = vunpack.c.l.b16 %v796
      %v893 = vunpack.c.l.b16 %v797
      %v894 = vunpack.c.l.b16 %v798
      %v895 = vunpack.c.l.b16 %v799
      %v896 = vunpack.c.l.b16 %v800
      %v897 = vunpack.c.l.b16 %v801
      %v898 = vunpack.c.l.b16 %v802
      %v899 = vunpack.c.l.b16 %v803
      %v900 = vunpack.c.l.b16 %v804
      %v901 = vunpack.c.l.b16 %v805
      %v902 = vunpack.c.l.b16 %v806
      %v903 = vunpack.c.l.b16 %v807
      %v904 = vunpack.c.l.b16 %v808
      %v905 = vunpack.c.l.b16 %v809
      %v906 = vunpack.c.l.b16 %v810
      %v907 = vunpack.c.l.b16 %v811
      %v908 = vunpack.c.l.b16 %v812
      %v909 = vunpack.c.l.b16 %v813
      %v910 = vunpack.c.l.b16 %v814
      %v911 = vunpack.c.l.b16 %v815
      %v912 = vunpack.c.l.b16 %v816
      %v913 = vunpack.c.l.b16 %v817
      %v914 = vunpack.c.l.b16 %v818
      %v915 = vunpack.c.l.b16 %v819
      %v916 = vunpack.c.l.b16 %v820
      %v917 = vunpack.c.l.b16 %v821
      %v918 = vunpack.c.l.b16 %v822
      %v919 = vunpack.c.l.b16 %v823
      %v920 = vunpack.c.l.b16 %v824
      %v921 = vunpack.c.l.b16 %v825
      %v922 = vunpack.c.l.b16 %v826
      %v923 = vunpack.c.l.b16 %v827
      %v924 = vunpack.c.l.b16 %v828
      %v925 = vunpack.c.l.b16 %v829
      %v926 = vunpack.c.l.b16 %v830
      %v927 = vunpack.c.l.b16 %v831
      %v928 = vunpack.c.l.b16 %v832
      %v929 = vunpack.c.l.b16 %v833
      %v930 = vunpack.c.l.b16 %v834
      %v931 = vunpack.c.l.b16 %v835
      %v932 = vunpack.c.l.b16 %v836
      %v933 = vunpack.c.l.b16 %v837
      %v934 = vunpack.c.l.b16 %v838
      %v935 = vunpack.c.l.b16 %v839
      %v936 = vunpack.c.l.b16 %v840
      %v937 = vunpack.c.l.b16 %v841
      %v938 = vpack.c.b16 %v891, %v890
      %v939 = vpack.c.b16 %v893, %v892
      %v940 = vpack.c.b16 %v895, %v894
      %v941 = vpack.c.b16 %v897, %v896
      %v942 = vpack.c.b16 %v899, %v898
      %v943 = vpack.c.b16 %v901, %v900
      %v944 = vpack.c.b16 %v903, %v902
      %v945 = vpack.c.b16 %v905, %v904
      %v946 = vpack.c.b16 %v907, %v906
      %v947 = vpack.c.b16 %v909, %v908
      %v948 = vpack.c.b16 %v911, %v910
      %v949 = vpack.c.b16 %v913, %v912
      %v950 = vpack.c.b16 %v915, %v914
      %v951 = vpack.c.b16 %v917, %v916
      %v952 = vpack.c.b16 %v919, %v918
      %v953 = vpack.c.b16 %v921, %v920
      %v954 = vpack.c.b16 %v923, %v922
      %v955 = vpack.c.b16 %v925, %v924
      %v956 = vpack.c.b16 %v927, %v926
      %v957 = vpack.c.b16 %v929, %v928
      %v958 = vpack.c.b16 %v931, %v930
      %v959 = vpack.c.b16 %v933, %v932
      %v960 = vpack.c.b16 %v935, %v934
      %v961 = vpack.c.b16 %v937, %v936
      %986 = vmatprep.subr.bf16.mxu0 0
      %987 = vmatpush1.bf16.msra.mxu0 %v938
      %988 = vmatprep.subr.bf16.mxu0 0
      %989 = vmatpush1.bf16.msra.mxu0 %v939
      %990 = vmatprep.subr.bf16.mxu0 0
      %991 = vmatpush1.bf16.msra.mxu0 %v940
      %992 = vmatprep.subr.bf16.mxu0 0
      %993 = vmatpush1.bf16.msra.mxu0 %v941
      %994 = vmatprep.subr.bf16.mxu0 0
      %995 = vmatpush1.bf16.msra.mxu0 %v942
      %996 = vmatprep.subr.bf16.mxu0 0
      %997 = vmatpush1.bf16.msra.mxu0 %v943
      %998 = vmatprep.subr.bf16.mxu0 0
      %999 = vmatpush1.bf16.msra.mxu0 %v944
      %1000 = vmatprep.subr.bf16.mxu0 0
      %1001 = vmatpush1.bf16.msra.mxu0 %v945
      %1002 = vmatprep.subr.bf16.mxu0 0
      %1003 = vmatpush1.bf16.msra.mxu0 %v946
      %1004 = vmatprep.subr.bf16.mxu0 0
      %1005 = vmatpush1.bf16.msra.mxu0 %v947
      %1006 = vmatprep.subr.bf16.mxu0 0
      %1007 = vmatpush1.bf16.msra.mxu0 %v948
      %1008 = vmatprep.subr.bf16.mxu0 0
      %1009 = vmatpush1.bf16.msra.mxu0 %v949
      %1010 = vmatprep.subr.bf16.mxu0 0
      %1011 = vmatpush1.bf16.msra.mxu0 %v950
      %1012 = vmatprep.subr.bf16.mxu0 0
      %1013 = vmatpush1.bf16.msra.mxu0 %v951
      %1014 = vmatprep.subr.bf16.mxu0 0
      %1015 = vmatpush1.bf16.msra.mxu0 %v952
      %1016 = vmatprep.subr.bf16.mxu0 0
      %1017 = vmatpush1.bf16.msra.mxu0 %v953
      %1018 = vmatprep.mubr.bf16.mxu0 %v582
      %1019 = vmatmul.mubr.bf16.gmra.mrb[0].mxu0 %v570
      %v1020 = vpop.f32.mrb[0].mxu0
      %v1021 = vadd.f32 0.0, %v1020
      %v1022 = vpop.f32.mrb[0].mxu0
      %v1023 = vpop.f32.mrb[0].mxu0
      %v1024 = vadd.f32 0.0, %v1023
      %v1025 = vpop.f32.mrb[0].mxu0
      %1026 = vmatprep.mubr.bf16.mxu0 %v594
      %1027 = vmatmul.mubr.bf16.gmra.mrb[0].mxu0 %v582
      %v1028 = vpop.f32.mrb[0].mxu0
      %v1029 = vadd.f32 0.0, %v1028
      %v1030 = vpop.f32.mrb[0].mxu0
      %v1031 = vpop.f32.mrb[0].mxu0
      %v1032 = vadd.f32 0.0, %v1031
      %v1033 = vpop.f32.mrb[0].mxu0
      %1034 = vmatprep.mubr.bf16.mxu0 %v606
      %1035 = vmatmul.mubr.bf16.gmra.mrb[0].mxu0 %v594
      %v1036 = vpop.f32.mrb[0].mxu0
      %v1037 = vadd.f32 0.0, %v1036
      %v1038 = vpop.f32.mrb[0].mxu0
      %v1039 = vpop.f32.mrb[0].mxu0
      %v1040 = vadd.f32 0.0, %v1039
      %v1041 = vpop.f32.mrb[0].mxu0
      %1042 = vmatprep.mubr.bf16.mxu0 %v618
      %1043 = vmatmul.mubr.bf16.gmra.mrb[0].mxu0 %v606
      %v1044 = vpop.f32.mrb[0].mxu0
      %v1045 = vadd.f32 0.0, %v1044
      %v1046 = vpop.f32.mrb[0].mxu0
      %v1047 = vpop.f32.mrb[0].mxu0
      %v1048 = vadd.f32 0.0, %v1047
      %v1049 = vpop.f32.mrb[0].mxu0
      %1050 = vmatprep.mubr.bf16.mxu0 %v630
      %1051 = vmatmul.mubr.bf16.gmra.mrb[0].mxu0 %v618
      %v1052 = vpop.f32.mrb[0].mxu0
      %v1053 = vadd.f32 0.0, %v1052
      %v1054 = vpop.f32.mrb[0].mxu0
      %v1055 = vpop.f32.mrb[0].mxu0
      %v1056 = vadd.f32 0.0, %v1055
      %v1057 = vpop.f32.mrb[0].mxu0
      %1058 = vmatprep.mubr.bf16.mxu0 %v642
      %1059 = vmatmul.mubr.bf16.gmra.mrb[0].mxu0 %v630
      %v1060 = vpop.f32.mrb[0].mxu0
      %v1061 = vadd.f32 0.0, %v1060
      %v1062 = vpop.f32.mrb[0].mxu0
      %v1063 = vpop.f32.mrb[0].mxu0
      %v1064 = vadd.f32 0.0, %v1063
      %v1065 = vpop.f32.mrb[0].mxu0
      %1066 = vmatprep.mubr.bf16.mxu0 %v654
      %1067 = vmatmul.mubr.bf16.gmra.mrb[0].mxu0 %v642
      %v1068 = vpop.f32.mrb[0].mxu0
      %v1069 = vadd.f32 0.0, %v1068
      %v1070 = vpop.f32.mrb[0].mxu0
      %v1071 = vpop.f32.mrb[0].mxu0
      %v1072 = vadd.f32 0.0, %v1071
      %v1073 = vpop.f32.mrb[0].mxu0
      %1074 = vmatprep.mubr.bf16.mxu0 %v666
      %1075 = vmatmul.mubr.bf16.gmra.mrb[0].mxu0 %v654
      %v1076 = vpop.f32.mrb[0].mxu0
      %v1077 = vadd.f32 0.0, %v1076
      %v1078 = vpop.f32.mrb[0].mxu0
      %v1079 = vpop.f32.mrb[0].mxu0
      %v1080 = vadd.f32 0.0, %v1079
      %v1081 = vpop.f32.mrb[0].mxu0
      %1082 = vmatprep.mubr.bf16.mxu0 %v678
      %1083 = vmatmul.mubr.bf16.gmra.mrb[0].mxu0 %v666
      %v1084 = vpop.f32.mrb[0].mxu0
      %v1085 = vadd.f32 0.0, %v1084
      %v1086 = vpop.f32.mrb[0].mxu0
      %v1087 = vpop.f32.mrb[0].mxu0
      %v1088 = vadd.f32 0.0, %v1087
      %v1089 = vpop.f32.mrb[0].mxu0
      %1090 = vmatprep.mubr.bf16.mxu0 %v690
      %1091 = vmatmul.mubr.bf16.gmra.mrb[0].mxu0 %v678
      %v1092 = vpop.f32.mrb[0].mxu0
      %v1093 = vadd.f32 0.0, %v1092
      %v1094 = vpop.f32.mrb[0].mxu0
      %v1095 = vpop.f32.mrb[0].mxu0
      %v1096 = vadd.f32 0.0, %v1095
      %v1097 = vpop.f32.mrb[0].mxu0
      %1098 = vmatprep.mubr.bf16.mxu0 %v702
      %1099 = vmatmul.mubr.bf16.gmra.mrb[0].mxu0 %v690
      %v1100 = vpop.f32.mrb[0].mxu0
      %v1101 = vadd.f32 0.0, %v1100
      %v1102 = vpop.f32.mrb[0].mxu0
      %v1103 = vpop.f32.mrb[0].mxu0
      %v1104 = vadd.f32 0.0, %v1103
      %v1105 = vpop.f32.mrb[0].mxu0
      %1106 = vmatprep.mubr.bf16.mxu0 %v714
      %1107 = vmatmul.mubr.bf16.gmra.mrb[0].mxu0 %v702
      %v1108 = vpop.f32.mrb[0].mxu0
      %v1109 = vadd.f32 0.0, %v1108
      %v1110 = vpop.f32.mrb[0].mxu0
      %v1111 = vpop.f32.mrb[0].mxu0
      %v1112 = vadd.f32 0.0, %v1111
      %v1113 = vpop.f32.mrb[0].mxu0
      %1114 = vmatprep.mubr.bf16.mxu0 %v726
      %1115 = vmatmul.mubr.bf16.gmra.mrb[0].mxu0 %v714
      %v1116 = vpop.f32.mrb[0].mxu0
      %v1117 = vadd.f32 0.0, %v1116
      %v1118 = vpop.f32.mrb[0].mxu0
      %v1119 = vpop.f32.mrb[0].mxu0
      %v1120 = vadd.f32 0.0, %v1119
      %v1121 = vpop.f32.mrb[0].mxu0
      %1122 = vmatprep.mubr.bf16.mxu0 %v738
      %1123 = vmatmul.mubr.bf16.gmra.mrb[0].mxu0 %v726
      %v1124 = vpop.f32.mrb[0].mxu0
      %v1125 = vadd.f32 0.0, %v1124
      %v1126 = vpop.f32.mrb[0].mxu0
      %v1127 = vpop.f32.mrb[0].mxu0
      %v1128 = vadd.f32 0.0, %v1127
      %v1129 = vpop.f32.mrb[0].mxu0
      %1130 = vmatprep.mubr.bf16.mxu0 %v750
      %1131 = vmatmul.mubr.bf16.gmra.mrb[0].mxu0 %v738
      %v1132 = vpop.f32.mrb[0].mxu0
      %v1133 = vadd.f32 0.0, %v1132
      %v1134 = vpop.f32.mrb[0].mxu0
      %v1135 = vpop.f32.mrb[0].mxu0
      %v1136 = vadd.f32 0.0, %v1135
      %v1137 = vpop.f32.mrb[0].mxu0
      %1138 = vmatprep.mubr.bf16.mxu0 %v762
      %1139 = vmatmul.mubr.bf16.gmra.mrb[0].mxu0 %v750
      %v1140 = vpop.f32.mrb[0].mxu0
      %v1141 = vadd.f32 0.0, %v1140
      %v1142 = vpop.f32.mrb[0].mxu0
      %v1143 = vpop.f32.mrb[0].mxu0
      %v1144 = vadd.f32 0.0, %v1143
      %v1145 = vpop.f32.mrb[0].mxu0
      %1146 = vdwg.mxu0
      %1147 = vmatprep.subr.bf16.mxu0 0
      %1148 = vmatpush1.bf16.msra.mxu0 %v954
      %1149 = vmatprep.subr.bf16.mxu0 0
      %1150 = vmatpush1.bf16.msra.mxu0 %v955
      %1151 = vmatprep.subr.bf16.mxu0 0
      %1152 = vmatpush1.bf16.msra.mxu0 %v956
      %1153 = vmatprep.subr.bf16.mxu0 0
      %1154 = vmatpush1.bf16.msra.mxu0 %v957
      %1155 = vmatprep.subr.bf16.mxu0 0
      %1156 = vmatpush1.bf16.msra.mxu0 %v958
      %1157 = vmatprep.subr.bf16.mxu0 0
      %1158 = vmatpush1.bf16.msra.mxu0 %v959
      %1159 = vmatprep.subr.bf16.mxu0 0
      %1160 = vmatpush1.bf16.msra.mxu0 %v960
      %1161 = vmatprep.subr.bf16.mxu0 0
      %1162 = vmatpush1.bf16.msra.mxu0 %v961
      %1163 = vmatprep.subr.bf16.mxu0 0
      %1164 = vmatpush1.bf16.msra.mxu0 0
      %1165 = vmatprep.subr.bf16.mxu0 0
      %1166 = vmatpush1.bf16.msra.mxu0 0
      %1167 = vmatprep.subr.bf16.mxu0 0
      %1168 = vmatpush1.bf16.msra.mxu0 0
      %1169 = vmatprep.subr.bf16.mxu0 0
      %1170 = vmatpush1.bf16.msra.mxu0 0
      %1171 = vmatprep.subr.bf16.mxu0 0
      %1172 = vmatpush1.bf16.msra.mxu0 0
      %1173 = vmatprep.subr.bf16.mxu0 0
      %1174 = vmatpush1.bf16.msra.mxu0 0
      %1175 = vmatprep.subr.bf16.mxu0 0
      %1176 = vmatpush1.bf16.msra.mxu0 0
      %1177 = vmatprep.subr.bf16.mxu0 0
      %1178 = vmatpush1.bf16.msra.mxu0 0
      %1179 = vmatprep.mubr.bf16.mxu0 0
      %1180 = vmatmul.mubr.bf16.gmra.mrb[0].mxu0 %v594
      %v1181 = vpop.f32.mrb[0].mxu0
      %v1182 = vadd.f32 %v1021, %v1181
      %v1183 = vpop.f32.mrb[0].mxu0
      %v1184 = vpop.f32.mrb[0].mxu0
      %v1185 = vadd.f32 %v1024, %v1184
      %v1186 = vpop.f32.mrb[0].mxu0
      %1187 = vmatprep.mubr.bf16.mxu0 0
      %1188 = vmatmul.mubr.bf16.gmra.mrb[0].mxu0 %v606
      %v1189 = vpop.f32.mrb[0].mxu0
      %v1190 = vadd.f32 %v1029, %v1189
      %v1191 = vpop.f32.mrb[0].mxu0
      %v1192 = vpop.f32.mrb[0].mxu0
      %v1193 = vadd.f32 %v1032, %v1192
      %v1194 = vpop.f32.mrb[0].mxu0
      %1195 = vmatprep.mubr.bf16.mxu0 0
      %1196 = vmatmul.mubr.bf16.gmra.mrb[0].mxu0 %v618
      %v1197 = vpop.f32.mrb[0].mxu0
      %v1198 = vadd.f32 %v1037, %v1197
      %v1199 = vpop.f32.mrb[0].mxu0
      %v1200 = vpop.f32.mrb[0].mxu0
      %v1201 = vadd.f32 %v1040, %v1200
      %v1202 = vpop.f32.mrb[0].mxu0
      %1203 = vmatprep.mubr.bf16.mxu0 0
      %1204 = vmatmul.mubr.bf16.gmra.mrb[0].mxu0 %v630
      %v1205 = vpop.f32.mrb[0].mxu0
      %v1206 = vadd.f32 %v1045, %v1205
      %v1207 = vpop.f32.mrb[0].mxu0
      %v1208 = vpop.f32.mrb[0].mxu0
      %v1209 = vadd.f32 %v1048, %v1208
      %v1210 = vpop.f32.mrb[0].mxu0
      %1211 = vmatprep.mubr.bf16.mxu0 0
      %1212 = vmatmul.mubr.bf16.gmra.mrb[0].mxu0 %v642
      %v1213 = vpop.f32.mrb[0].mxu0
      %v1214 = vadd.f32 %v1053, %v1213
      %v1215 = vpop.f32.mrb[0].mxu0
      %v1216 = vpop.f32.mrb[0].mxu0
      %v1217 = vadd.f32 %v1056, %v1216
      %v1218 = vpop.f32.mrb[0].mxu0
      %1219 = vmatprep.mubr.bf16.mxu0 0
      %1220 = vmatmul.mubr.bf16.gmra.mrb[0].mxu0 %v654
      %v1221 = vpop.f32.mrb[0].mxu0
      %v1222 = vadd.f32 %v1061, %v1221
      %v1223 = vpop.f32.mrb[0].mxu0
      %v1224 = vpop.f32.mrb[0].mxu0
      %v1225 = vadd.f32 %v1064, %v1224
      %v1226 = vpop.f32.mrb[0].mxu0
      %1227 = vmatprep.mubr.bf16.mxu0 0
      %1228 = vmatmul.mubr.bf16.gmra.mrb[0].mxu0 %v666
      %v1229 = vpop.f32.mrb[0].mxu0
      %v1230 = vadd.f32 %v1069, %v1229
      %v1231 = vpop.f32.mrb[0].mxu0
      %v1232 = vpop.f32.mrb[0].mxu0
      %v1233 = vadd.f32 %v1072, %v1232
      %v1234 = vpop.f32.mrb[0].mxu0
      %1235 = vmatprep.mubr.bf16.mxu0 0
      %1236 = vmatmul.mubr.bf16.gmra.mrb[0].mxu0 %v678
      %v1237 = vpop.f32.mrb[0].mxu0
      %v1238 = vadd.f32 %v1077, %v1237
      %v1239 = vpop.f32.mrb[0].mxu0
      %v1240 = vpop.f32.mrb[0].mxu0
      %v1241 = vadd.f32 %v1080, %v1240
      %v1242 = vpop.f32.mrb[0].mxu0
      %1243 = vmatprep.mubr.bf16.mxu0 0
      %1244 = vmatmul.mubr.bf16.gmra.mrb[0].mxu0 %v690
      %v1245 = vpop.f32.mrb[0].mxu0
      %v1246 = vadd.f32 %v1085, %v1245
      %v1247 = vpop.f32.mrb[0].mxu0
      %v1248 = vpop.f32.mrb[0].mxu0
      %v1249 = vadd.f32 %v1088, %v1248
      %v1250 = vpop.f32.mrb[0].mxu0
      %1251 = vmatprep.mubr.bf16.mxu0 0
      %1252 = vmatmul.mubr.bf16.gmra.mrb[0].mxu0 %v702
      %v1253 = vpop.f32.mrb[0].mxu0
      %v1254 = vadd.f32 %v1093, %v1253
      %v1255 = vpop.f32.mrb[0].mxu0
      %v1256 = vpop.f32.mrb[0].mxu0
      %v1257 = vadd.f32 %v1096, %v1256
      %v1258 = vpop.f32.mrb[0].mxu0
      %1259 = vmatprep.mubr.bf16.mxu0 0
      %1260 = vmatmul.mubr.bf16.gmra.mrb[0].mxu0 %v714
      %v1261 = vpop.f32.mrb[0].mxu0
      %v1262 = vadd.f32 %v1101, %v1261
      %v1263 = vpop.f32.mrb[0].mxu0
      %v1264 = vpop.f32.mrb[0].mxu0
      %v1265 = vadd.f32 %v1104, %v1264
      %v1266 = vpop.f32.mrb[0].mxu0
      %1267 = vmatprep.mubr.bf16.mxu0 0
      %1268 = vmatmul.mubr.bf16.gmra.mrb[0].mxu0 %v726
      %v1269 = vpop.f32.mrb[0].mxu0
      %v1270 = vadd.f32 %v1109, %v1269
      %v1271 = vpop.f32.mrb[0].mxu0
      %v1272 = vpop.f32.mrb[0].mxu0
      %v1273 = vadd.f32 %v1112, %v1272
      %v1274 = vpop.f32.mrb[0].mxu0
      %1275 = vmatprep.mubr.bf16.mxu0 0
      %1276 = vmatmul.mubr.bf16.gmra.mrb[0].mxu0 %v738
      %v1277 = vpop.f32.mrb[0].mxu0
      %v1278 = vadd.f32 %v1117, %v1277
      %v1279 = vpop.f32.mrb[0].mxu0
      %v1280 = vpop.f32.mrb[0].mxu0
      %v1281 = vadd.f32 %v1120, %v1280
      %v1282 = vpop.f32.mrb[0].mxu0
      %1283 = vmatprep.mubr.bf16.mxu0 0
      %1284 = vmatmul.mubr.bf16.gmra.mrb[0].mxu0 %v750
      %v1285 = vpop.f32.mrb[0].mxu0
      %v1286 = vadd.f32 %v1125, %v1285
      %v1287 = vpop.f32.mrb[0].mxu0
      %v1288 = vpop.f32.mrb[0].mxu0
      %v1289 = vadd.f32 %v1128, %v1288
      %v1290 = vpop.f32.mrb[0].mxu0
      %1291 = vmatprep.mubr.bf16.mxu0 0
      %1292 = vmatmul.mubr.bf16.gmra.mrb[0].mxu0 %v762
      %v1293 = vpop.f32.mrb[0].mxu0
      %v1294 = vadd.f32 %v1133, %v1293
      %v1295 = vpop.f32.mrb[0].mxu0
      %v1296 = vpop.f32.mrb[0].mxu0
      %v1297 = vadd.f32 %v1136, %v1296
      %v1298 = vpop.f32.mrb[0].mxu0
      %1299 = vmatprep.mubr.bf16.mxu0 0
      %1300 = vmatmul.mubr.bf16.gmra.mrb[0].mxu0 %v774
      %v1301 = vpop.f32.mrb[0].mxu0
      %v1302 = vadd.f32 %v1141, %v1301
      %v1303 = vpop.f32.mrb[0].mxu0
      %v1304 = vpop.f32.mrb[0].mxu0
      %v1305 = vadd.f32 %v1144, %v1304
      %v1306 = vpop.f32.mrb[0].mxu0
      %1307 = vdwg.mxu0
      %v1356 = vunpack.c.l.b16 %v510
      %v1357 = vunpack.c.l.b16 %v511
      %v1358 = vunpack.c.l.b16 %v512
      %v1359 = vunpack.c.l.b16 %v513
      %v1360 = vunpack.c.l.b16 %v514
      %v1361 = vunpack.c.l.b16 %v515
      %v1362 = vunpack.c.l.b16 %v516
      %v1363 = vunpack.c.l.b16 %v517
      %v1364 = vunpack.c.l.b16 %v518
      %v1365 = vunpack.c.l.b16 %v519
      %v1366 = vunpack.c.l.b16 %v520
      %v1367 = vunpack.c.l.b16 %v521
      %v1368 = vunpack.c.l.b16 %v522
      %v1369 = vunpack.c.l.b16 %v523
      %v1370 = vunpack.c.l.b16 %v524
      %v1371 = vunpack.c.l.b16 %v525
      %v1372 = vunpack.c.l.b16 %v526
      %v1373 = vunpack.c.l.b16 %v527
      %v1374 = vunpack.c.l.b16 %v528
      %v1375 = vunpack.c.l.b16 %v529
      %v1376 = vunpack.c.l.b16 %v530
      %v1377 = vunpack.c.l.b16 %v531
      %v1378 = vunpack.c.l.b16 %v532
      %v1379 = vunpack.c.l.b16 %v533
      %v1380 = vunpack.c.l.b16 %v534
      %v1381 = vunpack.c.l.b16 %v535
      %v1382 = vunpack.c.l.b16 %v536
      %v1383 = vunpack.c.l.b16 %v537
      %v1384 = vunpack.c.l.b16 %v538
      %v1385 = vunpack.c.l.b16 %v539
      %v1386 = vunpack.c.l.b16 %v540
      %v1387 = vunpack.c.l.b16 %v541
      %v1388 = vunpack.c.l.b16 %v542
      %v1389 = vunpack.c.l.b16 %v543
      %v1390 = vunpack.c.l.b16 %v544
      %v1391 = vunpack.c.l.b16 %v545
      %v1392 = vunpack.c.l.b16 %v546
      %v1393 = vunpack.c.l.b16 %v547
      %v1394 = vunpack.c.l.b16 %v548
      %v1395 = vunpack.c.l.b16 %v549
      %v1396 = vunpack.c.l.b16 %v550
      %v1397 = vunpack.c.l.b16 %v551
      %v1398 = vunpack.c.l.b16 %v552
      %v1399 = vunpack.c.l.b16 %v553
      %v1400 = vunpack.c.l.b16 %v554
      %v1401 = vunpack.c.l.b16 %v555
      %v1402 = vunpack.c.l.b16 %v556
      %v1403 = vunpack.c.l.b16 %v557
      %v1404 = vpack.c.b16 %v1357, %v1356
      %v1405 = vpack.c.b16 %v1359, %v1358
      %v1406 = vpack.c.b16 %v1361, %v1360
      %v1407 = vpack.c.b16 %v1363, %v1362
      %v1408 = vpack.c.b16 %v1365, %v1364
      %v1409 = vpack.c.b16 %v1367, %v1366
      %v1410 = vpack.c.b16 %v1369, %v1368
      %v1411 = vpack.c.b16 %v1371, %v1370
      %v1412 = vpack.c.b16 %v1373, %v1372
      %v1413 = vpack.c.b16 %v1375, %v1374
      %v1414 = vpack.c.b16 %v1377, %v1376
      %v1415 = vpack.c.b16 %v1379, %v1378
      %v1416 = vpack.c.b16 %v1381, %v1380
      %v1417 = vpack.c.b16 %v1383, %v1382
      %v1418 = vpack.c.b16 %v1385, %v1384
      %v1419 = vpack.c.b16 %v1387, %v1386
      %v1420 = vpack.c.b16 %v1389, %v1388
      %v1421 = vpack.c.b16 %v1391, %v1390
      %v1422 = vpack.c.b16 %v1393, %v1392
      %v1423 = vpack.c.b16 %v1395, %v1394
      %v1424 = vpack.c.b16 %v1397, %v1396
      %v1425 = vpack.c.b16 %v1399, %v1398
      %v1426 = vpack.c.b16 %v1401, %v1400
      %v1427 = vpack.c.b16 %v1403, %v1402
      %1452 = vmatprep.subr.bf16.mxu0 0
      %1453 = vmatpush1.bf16.msra.mxu0 %v1404
      %1454 = vmatprep.subr.bf16.mxu0 0
      %1455 = vmatpush1.bf16.msra.mxu0 %v1405
      %1456 = vmatprep.subr.bf16.mxu0 0
      %1457 = vmatpush1.bf16.msra.mxu0 %v1406
      %1458 = vmatprep.subr.bf16.mxu0 0
      %1459 = vmatpush1.bf16.msra.mxu0 %v1407
      %1460 = vmatprep.subr.bf16.mxu0 0
      %1461 = vmatpush1.bf16.msra.mxu0 %v1408
      %1462 = vmatprep.subr.bf16.mxu0 0
      %1463 = vmatpush1.bf16.msra.mxu0 %v1409
      %1464 = vmatprep.subr.bf16.mxu0 0
      %1465 = vmatpush1.bf16.msra.mxu0 %v1410
      %1466 = vmatprep.subr.bf16.mxu0 0
      %1467 = vmatpush1.bf16.msra.mxu0 %v1411
      %1468 = vmatprep.subr.bf16.mxu0 0
      %1469 = vmatpush1.bf16.msra.mxu0 %v1412
      %1470 = vmatprep.subr.bf16.mxu0 0
      %1471 = vmatpush1.bf16.msra.mxu0 %v1413
      %1472 = vmatprep.subr.bf16.mxu0 0
      %1473 = vmatpush1.bf16.msra.mxu0 %v1414
      %1474 = vmatprep.subr.bf16.mxu0 0
      %1475 = vmatpush1.bf16.msra.mxu0 %v1415
      %1476 = vmatprep.subr.bf16.mxu0 0
      %1477 = vmatpush1.bf16.msra.mxu0 %v1416
      %1478 = vmatprep.subr.bf16.mxu0 0
      %1479 = vmatpush1.bf16.msra.mxu0 %v1417
      %1480 = vmatprep.subr.bf16.mxu0 0
      %1481 = vmatpush1.bf16.msra.mxu0 %v1418
      %1482 = vmatprep.subr.bf16.mxu0 0
      %1483 = vmatpush1.bf16.msra.mxu0 %v1419
      %1484 = vmatprep.mubr.bf16.mxu0 %v446
      %1485 = vmatmul.mubr.bf16.gmra.mrb[0].mxu0 %v444
      %v1486 = vpop.f32.mrb[0].mxu0
      %v1487 = vadd.f32 %v1182, %v1486
      %v1488 = vpop.f32.mrb[0].mxu0
      %v1489 = vpop.f32.mrb[0].mxu0
      %v1490 = vadd.f32 %v1185, %v1489
      %v1491 = vpop.f32.mrb[0].mxu0
      %1492 = vmatprep.mubr.bf16.mxu0 %v448
      %1493 = vmatmul.mubr.bf16.gmra.mrb[0].mxu0 %v446
      %v1494 = vpop.f32.mrb[0].mxu0
      %v1495 = vadd.f32 %v1190, %v1494
      %v1496 = vpop.f32.mrb[0].mxu0
      %v1497 = vpop.f32.mrb[0].mxu0
      %v1498 = vadd.f32 %v1193, %v1497
      %v1499 = vpop.f32.mrb[0].mxu0
      %1500 = vmatprep.mubr.bf16.mxu0 %v450
      %1501 = vmatmul.mubr.bf16.gmra.mrb[0].mxu0 %v448
      %v1502 = vpop.f32.mrb[0].mxu0
      %v1503 = vadd.f32 %v1198, %v1502
      %v1504 = vpop.f32.mrb[0].mxu0
      %v1505 = vpop.f32.mrb[0].mxu0
      %v1506 = vadd.f32 %v1201, %v1505
      %v1507 = vpop.f32.mrb[0].mxu0
      %1508 = vmatprep.mubr.bf16.mxu0 %v452
      %1509 = vmatmul.mubr.bf16.gmra.mrb[0].mxu0 %v450
      %v1510 = vpop.f32.mrb[0].mxu0
      %v1511 = vadd.f32 %v1206, %v1510
      %v1512 = vpop.f32.mrb[0].mxu0
      %v1513 = vpop.f32.mrb[0].mxu0
      %v1514 = vadd.f32 %v1209, %v1513
      %v1515 = vpop.f32.mrb[0].mxu0
      %1516 = vmatprep.mubr.bf16.mxu0 %v454
      %1517 = vmatmul.mubr.bf16.gmra.mrb[0].mxu0 %v452
      %v1518 = vpop.f32.mrb[0].mxu0
      %v1519 = vadd.f32 %v1214, %v1518
      %v1520 = vpop.f32.mrb[0].mxu0
      %v1521 = vpop.f32.mrb[0].mxu0
      %v1522 = vadd.f32 %v1217, %v1521
      %v1523 = vpop.f32.mrb[0].mxu0
      %1524 = vmatprep.mubr.bf16.mxu0 %v456
      %1525 = vmatmul.mubr.bf16.gmra.mrb[0].mxu0 %v454
      %v1526 = vpop.f32.mrb[0].mxu0
      %v1527 = vadd.f32 %v1222, %v1526
      %v1528 = vpop.f32.mrb[0].mxu0
      %v1529 = vpop.f32.mrb[0].mxu0
      %v1530 = vadd.f32 %v1225, %v1529
      %v1531 = vpop.f32.mrb[0].mxu0
      %1532 = vmatprep.mubr.bf16.mxu0 %v458
      %1533 = vmatmul.mubr.bf16.gmra.mrb[0].mxu0 %v456
      %v1534 = vpop.f32.mrb[0].mxu0
      %v1535 = vadd.f32 %v1230, %v1534
      %v1536 = vpop.f32.mrb[0].mxu0
      %v1537 = vpop.f32.mrb[0].mxu0
      %v1538 = vadd.f32 %v1233, %v1537
      %v1539 = vpop.f32.mrb[0].mxu0
      %1540 = vmatprep.mubr.bf16.mxu0 %v460
      %1541 = vmatmul.mubr.bf16.gmra.mrb[0].mxu0 %v458
      %v1542 = vpop.f32.mrb[0].mxu0
      %v1543 = vadd.f32 %v1238, %v1542
      %v1544 = vpop.f32.mrb[0].mxu0
      %v1545 = vpop.f32.mrb[0].mxu0
      %v1546 = vadd.f32 %v1241, %v1545
      %v1547 = vpop.f32.mrb[0].mxu0
      %1548 = vmatprep.mubr.bf16.mxu0 %v462
      %1549 = vmatmul.mubr.bf16.gmra.mrb[0].mxu0 %v460
      %v1550 = vpop.f32.mrb[0].mxu0
      %v1551 = vadd.f32 %v1246, %v1550
      %v1552 = vpop.f32.mrb[0].mxu0
      %v1553 = vpop.f32.mrb[0].mxu0
      %v1554 = vadd.f32 %v1249, %v1553
      %v1555 = vpop.f32.mrb[0].mxu0
      %1556 = vmatprep.mubr.bf16.mxu0 %v464
      %1557 = vmatmul.mubr.bf16.gmra.mrb[0].mxu0 %v462
      %v1558 = vpop.f32.mrb[0].mxu0
      %v1559 = vadd.f32 %v1254, %v1558
      %v1560 = vpop.f32.mrb[0].mxu0
      %v1561 = vpop.f32.mrb[0].mxu0
      %v1562 = vadd.f32 %v1257, %v1561
      %v1563 = vpop.f32.mrb[0].mxu0
      %1564 = vmatprep.mubr.bf16.mxu0 %v466
      %1565 = vmatmul.mubr.bf16.gmra.mrb[0].mxu0 %v464
      %v1566 = vpop.f32.mrb[0].mxu0
      %v1567 = vadd.f32 %v1262, %v1566
      %v1568 = vpop.f32.mrb[0].mxu0
      %v1569 = vpop.f32.mrb[0].mxu0
      %v1570 = vadd.f32 %v1265, %v1569
      %v1571 = vpop.f32.mrb[0].mxu0
      %1572 = vmatprep.mubr.bf16.mxu0 %v468
      %1573 = vmatmul.mubr.bf16.gmra.mrb[0].mxu0 %v466
      %v1574 = vpop.f32.mrb[0].mxu0
      %v1575 = vadd.f32 %v1270, %v1574
      %v1576 = vpop.f32.mrb[0].mxu0
      %v1577 = vpop.f32.mrb[0].mxu0
      %v1578 = vadd.f32 %v1273, %v1577
      %v1579 = vpop.f32.mrb[0].mxu0
      %1580 = vmatprep.mubr.bf16.mxu0 %v470
      %1581 = vmatmul.mubr.bf16.gmra.mrb[0].mxu0 %v468
      %v1582 = vpop.f32.mrb[0].mxu0
      %v1583 = vadd.f32 %v1278, %v1582
      %v1584 = vpop.f32.mrb[0].mxu0
      %v1585 = vpop.f32.mrb[0].mxu0
      %v1586 = vadd.f32 %v1281, %v1585
      %v1587 = vpop.f32.mrb[0].mxu0
      %1588 = vmatprep.mubr.bf16.mxu0 %v472
      %1589 = vmatmul.mubr.bf16.gmra.mrb[0].mxu0 %v470
      %v1590 = vpop.f32.mrb[0].mxu0
      %v1591 = vadd.f32 %v1286, %v1590
      %v1592 = vpop.f32.mrb[0].mxu0
      %v1593 = vpop.f32.mrb[0].mxu0
      %v1594 = vadd.f32 %v1289, %v1593
      %v1595 = vpop.f32.mrb[0].mxu0
      %1596 = vmatprep.mubr.bf16.mxu0 %v474
      %1597 = vmatmul.mubr.bf16.gmra.mrb[0].mxu0 %v472
      %v1598 = vpop.f32.mrb[0].mxu0
      %v1599 = vadd.f32 %v1294, %v1598
      %v1600 = vpop.f32.mrb[0].mxu0
      %v1601 = vpop.f32.mrb[0].mxu0
      %v1602 = vadd.f32 %v1297, %v1601
      %v1603 = vpop.f32.mrb[0].mxu0
      %1604 = vmatprep.mubr.bf16.mxu0 %v498
      %1605 = vmatmul.mubr.bf16.gmra.mrb[0].mxu0 %v474
      %v1606 = vpop.f32.mrb[0].mxu0
      %v1607 = vadd.f32 %v1302, %v1606
      %v1608 = vpop.f32.mrb[0].mxu0
      %v1609 = vpop.f32.mrb[0].mxu0
      %v1610 = vadd.f32 %v1305, %v1609
      %v1611 = vpop.f32.mrb[0].mxu0
      %1612 = vdwg.mxu0
      %1613 = vmatprep.subr.bf16.mxu0 0
      %1614 = vmatpush1.bf16.msra.mxu0 %v1420
      %1615 = vmatprep.subr.bf16.mxu0 0
      %1616 = vmatpush1.bf16.msra.mxu0 %v1421
      %1617 = vmatprep.subr.bf16.mxu0 0
      %1618 = vmatpush1.bf16.msra.mxu0 %v1422
      %1619 = vmatprep.subr.bf16.mxu0 0
      %1620 = vmatpush1.bf16.msra.mxu0 %v1423
      %1621 = vmatprep.subr.bf16.mxu0 0
      %1622 = vmatpush1.bf16.msra.mxu0 %v1424
      %1623 = vmatprep.subr.bf16.mxu0 0
      %1624 = vmatpush1.bf16.msra.mxu0 %v1425
      %1625 = vmatprep.subr.bf16.mxu0 0
      %1626 = vmatpush1.bf16.msra.mxu0 %v1426
      %1627 = vmatprep.subr.bf16.mxu0 0
      %1628 = vmatpush1.bf16.msra.mxu0 %v1427
      %1629 = vmatprep.subr.bf16.mxu0 0
      %1630 = vmatpush1.bf16.msra.mxu0 0
      %1631 = vmatprep.subr.bf16.mxu0 0
      %1632 = vmatpush1.bf16.msra.mxu0 0
      %1633 = vmatprep.subr.bf16.mxu0 0
      %1634 = vmatpush1.bf16.msra.mxu0 0
      %1635 = vmatprep.subr.bf16.mxu0 0
      %1636 = vmatpush1.bf16.msra.mxu0 0
      %1637 = vmatprep.subr.bf16.mxu0 0
      %1638 = vmatpush1.bf16.msra.mxu0 0
      %1639 = vmatprep.subr.bf16.mxu0 0
      %1640 = vmatpush1.bf16.msra.mxu0 0
      %1641 = vmatprep.subr.bf16.mxu0 0
      %1642 = vmatpush1.bf16.msra.mxu0 0
      %1643 = vmatprep.subr.bf16.mxu0 0
      %1644 = vmatpush1.bf16.msra.mxu0 0
      %1645 = vmatprep.mubr.bf16.mxu0 0
      %1646 = vmatmul.mubr.bf16.gmra.mrb[0].mxu0 %v448
      %v1647 = vpop.f32.mrb[0].mxu0
      %v1648 = vadd.f32 %v1487, %v1647
      %v1649 = vpop.f32.mrb[0].mxu0
      %v1650 = vpop.f32.mrb[0].mxu0
      %v1651 = vadd.f32 %v1490, %v1650
      %v1652 = vpop.f32.mrb[0].mxu0
      %1653 = vmatprep.mubr.bf16.mxu0 0
      %1654 = vmatmul.mubr.bf16.gmra.mrb[0].mxu0 %v450
      %v1655 = vpop.f32.mrb[0].mxu0
      %v1656 = vadd.f32 %v1495, %v1655
      %v1657 = vpop.f32.mrb[0].mxu0
      %v1658 = vpop.f32.mrb[0].mxu0
      %v1659 = vadd.f32 %v1498, %v1658
      %v1660 = vpop.f32.mrb[0].mxu0
      %1661 = vmatprep.mubr.bf16.mxu0 0
      %1662 = vmatmul.mubr.bf16.gmra.mrb[0].mxu0 %v452
      %v1663 = vpop.f32.mrb[0].mxu0
      %v1664 = vadd.f32 %v1503, %v1663
      %v1665 = vpop.f32.mrb[0].mxu0
      %v1666 = vpop.f32.mrb[0].mxu0
      %v1667 = vadd.f32 %v1506, %v1666
      %v1668 = vpop.f32.mrb[0].mxu0
      %1669 = vmatprep.mubr.bf16.mxu0 0
      %1670 = vmatmul.mubr.bf16.gmra.mrb[0].mxu0 %v454
      %v1671 = vpop.f32.mrb[0].mxu0
      %v1672 = vadd.f32 %v1511, %v1671
      %v1673 = vpop.f32.mrb[0].mxu0
      %v1674 = vpop.f32.mrb[0].mxu0
      %v1675 = vadd.f32 %v1514, %v1674
      %v1676 = vpop.f32.mrb[0].mxu0
      %1677 = vmatprep.mubr.bf16.mxu0 0
      %1678 = vmatmul.mubr.bf16.gmra.mrb[0].mxu0 %v456
      %v1679 = vpop.f32.mrb[0].mxu0
      %v1680 = vadd.f32 %v1519, %v1679
      %v1681 = vpop.f32.mrb[0].mxu0
      %v1682 = vpop.f32.mrb[0].mxu0
      %v1683 = vadd.f32 %v1522, %v1682
      %v1684 = vpop.f32.mrb[0].mxu0
      %1685 = vmatprep.mubr.bf16.mxu0 0
      %1686 = vmatmul.mubr.bf16.gmra.mrb[0].mxu0 %v458
      %v1687 = vpop.f32.mrb[0].mxu0
      %v1688 = vadd.f32 %v1527, %v1687
      %v1689 = vpop.f32.mrb[0].mxu0
      %v1690 = vpop.f32.mrb[0].mxu0
      %v1691 = vadd.f32 %v1530, %v1690
      %v1692 = vpop.f32.mrb[0].mxu0
      %1693 = vmatprep.mubr.bf16.mxu0 0
      %1694 = vmatmul.mubr.bf16.gmra.mrb[0].mxu0 %v460
      %v1695 = vpop.f32.mrb[0].mxu0
      %v1696 = vadd.f32 %v1535, %v1695
      %v1697 = vpop.f32.mrb[0].mxu0
      %v1698 = vpop.f32.mrb[0].mxu0
      %v1699 = vadd.f32 %v1538, %v1698
      %v1700 = vpop.f32.mrb[0].mxu0
      %1701 = vmatprep.mubr.bf16.mxu0 0
      %1702 = vmatmul.mubr.bf16.gmra.mrb[0].mxu0 %v462
      %v1703 = vpop.f32.mrb[0].mxu0
      %v1704 = vadd.f32 %v1543, %v1703
      %v1705 = vpop.f32.mrb[0].mxu0
      %v1706 = vpop.f32.mrb[0].mxu0
      %v1707 = vadd.f32 %v1546, %v1706
      %v1708 = vpop.f32.mrb[0].mxu0
      %1709 = vmatprep.mubr.bf16.mxu0 0
      %1710 = vmatmul.mubr.bf16.gmra.mrb[0].mxu0 %v464
      %v1711 = vpop.f32.mrb[0].mxu0
      %v1712 = vadd.f32 %v1551, %v1711
      %v1713 = vpop.f32.mrb[0].mxu0
      %v1714 = vpop.f32.mrb[0].mxu0
      %v1715 = vadd.f32 %v1554, %v1714
      %v1716 = vpop.f32.mrb[0].mxu0
      %1717 = vmatprep.mubr.bf16.mxu0 0
      %1718 = vmatmul.mubr.bf16.gmra.mrb[0].mxu0 %v466
      %v1719 = vpop.f32.mrb[0].mxu0
      %v1720 = vadd.f32 %v1559, %v1719
      %v1721 = vpop.f32.mrb[0].mxu0
      %v1722 = vpop.f32.mrb[0].mxu0
      %v1723 = vadd.f32 %v1562, %v1722
      %v1724 = vpop.f32.mrb[0].mxu0
      %1725 = vmatprep.mubr.bf16.mxu0 0
      %1726 = vmatmul.mubr.bf16.gmra.mrb[0].mxu0 %v468
      %v1727 = vpop.f32.mrb[0].mxu0
      %v1728 = vadd.f32 %v1567, %v1727
      %v1729 = vpop.f32.mrb[0].mxu0
      %v1730 = vpop.f32.mrb[0].mxu0
      %v1731 = vadd.f32 %v1570, %v1730
      %v1732 = vpop.f32.mrb[0].mxu0
      %1733 = vmatprep.mubr.bf16.mxu0 0
      %1734 = vmatmul.mubr.bf16.gmra.mrb[0].mxu0 %v470
      %v1735 = vpop.f32.mrb[0].mxu0
      %v1736 = vadd.f32 %v1575, %v1735
      %v1737 = vpop.f32.mrb[0].mxu0
      %v1738 = vpop.f32.mrb[0].mxu0
      %v1739 = vadd.f32 %v1578, %v1738
      %v1740 = vpop.f32.mrb[0].mxu0
      %1741 = vmatprep.mubr.bf16.mxu0 0
      %1742 = vmatmul.mubr.bf16.gmra.mrb[0].mxu0 %v472
      %v1743 = vpop.f32.mrb[0].mxu0
      %v1744 = vadd.f32 %v1583, %v1743
      %v1745 = vpop.f32.mrb[0].mxu0
      %v1746 = vpop.f32.mrb[0].mxu0
      %v1747 = vadd.f32 %v1586, %v1746
      %v1748 = vpop.f32.mrb[0].mxu0
      %1749 = vmatprep.mubr.bf16.mxu0 0
      %1750 = vmatmul.mubr.bf16.gmra.mrb[0].mxu0 %v474
      %v1751 = vpop.f32.mrb[0].mxu0
      %v1752 = vadd.f32 %v1591, %v1751
      %v1753 = vpop.f32.mrb[0].mxu0
      %v1754 = vpop.f32.mrb[0].mxu0
      %v1755 = vadd.f32 %v1594, %v1754
      %v1756 = vpop.f32.mrb[0].mxu0
      %1757 = vmatprep.mubr.bf16.mxu0 0
      %1758 = vmatmul.mubr.bf16.gmra.mrb[0].mxu0 %v498
      %v1759 = vpop.f32.mrb[0].mxu0
      %v1760 = vadd.f32 %v1599, %v1759
      %v1761 = vpop.f32.mrb[0].mxu0
      %v1762 = vpop.f32.mrb[0].mxu0
      %v1763 = vadd.f32 %v1602, %v1762
      %v1764 = vpop.f32.mrb[0].mxu0
      %1765 = vmatprep.mubr.bf16.mxu0 0
      %1766 = vmatmul.mubr.bf16.gmra.mrb[0].mxu0 %v507
      %v1767 = vpop.f32.mrb[0].mxu0
      %v1768 = vadd.f32 %v1607, %v1767
      %v1769 = vpop.f32.mrb[0].mxu0
      %v1770 = vpop.f32.mrb[0].mxu0
      %v1771 = vadd.f32 %v1610, %v1770
      %v1772 = vpop.f32.mrb[0].mxu0
      %1773 = vdwg.mxu0
      %vm1774 = vcmask 1046528
      %v1775 = vrot.slane %v444, 1
      %v1776 = vrot.slane %v445, 1
      %v1777 = vsel %vm1774, %v1775, %v1776
      %v1778 = vrot.slane %v446, 1
      %v1779 = vrot.slane %v447, 1
      %v1780 = vsel %vm1774, %v1778, %v1779
      %v1781 = vrot.slane %v448, 1
      %v1782 = vrot.slane %v449, 1
      %v1783 = vsel %vm1774, %v1781, %v1782
      %v1784 = vrot.slane %v450, 1
      %v1785 = vrot.slane %v451, 1
      %v1786 = vsel %vm1774, %v1784, %v1785
      %v1787 = vrot.slane %v452, 1
      %v1788 = vrot.slane %v453, 1
      %v1789 = vsel %vm1774, %v1787, %v1788
      %v1790 = vrot.slane %v454, 1
      %v1791 = vrot.slane %v455, 1
      %v1792 = vsel %vm1774, %v1790, %v1791
      %v1793 = vrot.slane %v456, 1
      %v1794 = vrot.slane %v457, 1
      %v1795 = vsel %vm1774, %v1793, %v1794
      %v1796 = vrot.slane %v458, 1
      %v1797 = vrot.slane %v459, 1
      %v1798 = vsel %vm1774, %v1796, %v1797
      %v1799 = vrot.slane %v460, 1
      %v1800 = vrot.slane %v461, 1
      %v1801 = vsel %vm1774, %v1799, %v1800
      %v1802 = vrot.slane %v462, 1
      %v1803 = vrot.slane %v463, 1
      %v1804 = vsel %vm1774, %v1802, %v1803
      %v1805 = vrot.slane %v464, 1
      %v1806 = vrot.slane %v465, 1
      %v1807 = vsel %vm1774, %v1805, %v1806
      %v1808 = vrot.slane %v466, 1
      %v1809 = vrot.slane %v467, 1
      %v1810 = vsel %vm1774, %v1808, %v1809
      %v1811 = vrot.slane %v468, 1
      %v1812 = vrot.slane %v469, 1
      %v1813 = vsel %vm1774, %v1811, %v1812
      %v1814 = vrot.slane %v470, 1
      %v1815 = vrot.slane %v471, 1
      %v1816 = vsel %vm1774, %v1814, %v1815
      %v1817 = vrot.slane %v472, 1
      %v1818 = vrot.slane %v473, 1
      %v1819 = vsel %vm1774, %v1817, %v1818
      %v1820 = vrot.slane %v474, 1
      %v1821 = vrot.slane %v475, 1
      %v1822 = vsel %vm1774, %v1820, %v1821
      %v1823 = vrot.slane %v498, 1
      %v1824 = vrot.slane %v499, 1
      %v1825 = vsel %vm1774, %v1823, %v1824
      %v1826 = vrot.slane %v507, 1
      %v1827 = vrot.slane %v508, 1
      %v1828 = vsel %vm1774, %v1826, %v1827
      %s1847 = scalar_lea.vmem %s2, 384
      %v1848 = vld [vmem:[%s1847] sm:$0xf]
      %v1849 = vld [vmem:[%s1847 + $0x4] sm:$0xf]
      %v1850 = vld [vmem:[%s1847 + $0x8] sm:$0xf]
      %v1851 = vld [vmem:[%s1847 + $0xc] sm:$0xf]
      %v1852 = vld [vmem:[%s1847 + $0x10] sm:$0xf]
      %v1853 = vld [vmem:[%s1847 + $0x14] sm:$0xf]
      %v1854 = vld [vmem:[%s1847 + $0x18] sm:$0xf]
      %v1855 = vld [vmem:[%s1847 + $0x1c] sm:$0xf]
      %v1856 = vld [vmem:[%s1847 + $0x20] sm:$0xf]
      %v1857 = vld [vmem:[%s1847 + $0x24] sm:$0xf]
      %v1858 = vld [vmem:[%s1847 + $0x28] sm:$0xf]
      %v1859 = vld [vmem:[%s1847 + $0x2c] sm:$0xf]
      %v1860 = vld [vmem:[%s1847 + $0x30] sm:$0xf]
      %v1861 = vld [vmem:[%s1847 + $0x34] sm:$0xf]
      %v1862 = vld [vmem:[%s1847 + $0x38] sm:$0xf]
      %v1863 = vld [vmem:[%s1847 + $0x3c] sm:$0xf]
      %v1864 = vld [vmem:[%s1847 + $0x40] sm:$0xf]
      %v1865 = vld [vmem:[%s1847 + $0x44] sm:$0xf]
      %v1866 = vld [vmem:[%s1847 + $0x48] sm:$0xf]
      %v1867 = vld [vmem:[%s1847 + $0x4c] sm:$0xf]
      %v1868 = vld [vmem:[%s1847 + $0x50] sm:$0xf]
      %v1869 = vld [vmem:[%s1847 + $0x54] sm:$0xf]
      %v1870 = vld [vmem:[%s1847 + $0x58] sm:$0xf]
      %v1871 = vld [vmem:[%s1847 + $0x5c] sm:$0xf]
      %v1872 = vld [vmem:[%s1847 + $0x60] sm:$0xf]
      %v1873 = vld [vmem:[%s1847 + $0x64] sm:$0xf]
      %v1874 = vld [vmem:[%s1847 + $0x68] sm:$0xf]
      %v1875 = vld [vmem:[%s1847 + $0x6c] sm:$0xf]
      %v1876 = vld [vmem:[%s1847 + $0x70] sm:$0xf]
      %v1877 = vld [vmem:[%s1847 + $0x74] sm:$0xf]
      %v1878 = vld [vmem:[%s1847 + $0x78] sm:$0xf]
      %v1879 = vld [vmem:[%s1847 + $0x7c] sm:$0xf]
      %v1880 = vld [vmem:[%s1847 + $0x80] sm:$0xf]
      %v1881 = vld [vmem:[%s1847 + $0x84] sm:$0xf]
      %v1882 = vld [vmem:[%s1847 + $0x88] sm:$0xf]
      %v1883 = vld [vmem:[%s1847 + $0x8c] sm:$0xf]
      %v1884 = vld [vmem:[%s1847 + $0x90] sm:$0xf]
      %v1885 = vld [vmem:[%s1847 + $0x94] sm:$0xf]
      %v1886 = vld [vmem:[%s1847 + $0x98] sm:$0xf]
      %v1887 = vld [vmem:[%s1847 + $0x9c] sm:$0xf]
      %v1888 = vld [vmem:[%s1847 + $0xa0] sm:$0xf]
      %v1889 = vld [vmem:[%s1847 + $0xa4] sm:$0xf]
      %v1890 = vld [vmem:[%s1847 + $0xa8] sm:$0xf]
      %v1891 = vld [vmem:[%s1847 + $0xac] sm:$0xf]
      %v1892 = vld [vmem:[%s1847 + $0xb0] sm:$0xf]
      %v1893 = vld [vmem:[%s1847 + $0xb4] sm:$0xf]
      %v1894 = vld [vmem:[%s1847 + $0xb8] sm:$0xf]
      %v1895 = vld [vmem:[%s1847 + $0xbc] sm:$0xf]
      %v1944 = vunpack.c.l.b16 %v1848
      %v1945 = vunpack.c.l.b16 %v1849
      %v1946 = vunpack.c.l.b16 %v1850
      %v1947 = vunpack.c.l.b16 %v1851
      %v1948 = vunpack.c.l.b16 %v1852
      %v1949 = vunpack.c.l.b16 %v1853
      %v1950 = vunpack.c.l.b16 %v1854
      %v1951 = vunpack.c.l.b16 %v1855
      %v1952 = vunpack.c.l.b16 %v1856
      %v1953 = vunpack.c.l.b16 %v1857
      %v1954 = vunpack.c.l.b16 %v1858
      %v1955 = vunpack.c.l.b16 %v1859
      %v1956 = vunpack.c.l.b16 %v1860
      %v1957 = vunpack.c.l.b16 %v1861
      %v1958 = vunpack.c.l.b16 %v1862
      %v1959 = vunpack.c.l.b16 %v1863
      %v1960 = vunpack.c.l.b16 %v1864
      %v1961 = vunpack.c.l.b16 %v1865
      %v1962 = vunpack.c.l.b16 %v1866
      %v1963 = vunpack.c.l.b16 %v1867
      %v1964 = vunpack.c.l.b16 %v1868
      %v1965 = vunpack.c.l.b16 %v1869
      %v1966 = vunpack.c.l.b16 %v1870
      %v1967 = vunpack.c.l.b16 %v1871
      %v1968 = vunpack.c.l.b16 %v1872
      %v1969 = vunpack.c.l.b16 %v1873
      %v1970 = vunpack.c.l.b16 %v1874
      %v1971 = vunpack.c.l.b16 %v1875
      %v1972 = vunpack.c.l.b16 %v1876
      %v1973 = vunpack.c.l.b16 %v1877
      %v1974 = vunpack.c.l.b16 %v1878
      %v1975 = vunpack.c.l.b16 %v1879
      %v1976 = vunpack.c.l.b16 %v1880
      %v1977 = vunpack.c.l.b16 %v1881
      %v1978 = vunpack.c.l.b16 %v1882
      %v1979 = vunpack.c.l.b16 %v1883
      %v1980 = vunpack.c.l.b16 %v1884
      %v1981 = vunpack.c.l.b16 %v1885
      %v1982 = vunpack.c.l.b16 %v1886
      %v1983 = vunpack.c.l.b16 %v1887
      %v1984 = vunpack.c.l.b16 %v1888
      %v1985 = vunpack.c.l.b16 %v1889
      %v1986 = vunpack.c.l.b16 %v1890
      %v1987 = vunpack.c.l.b16 %v1891
      %v1988 = vunpack.c.l.b16 %v1892
      %v1989 = vunpack.c.l.b16 %v1893
      %v1990 = vunpack.c.l.b16 %v1894
      %v1991 = vunpack.c.l.b16 %v1895
      %v1992 = vpack.c.b16 %v1945, %v1944
      %v1993 = vpack.c.b16 %v1947, %v1946
      %v1994 = vpack.c.b16 %v1949, %v1948
      %v1995 = vpack.c.b16 %v1951, %v1950
      %v1996 = vpack.c.b16 %v1953, %v1952
      %v1997 = vpack.c.b16 %v1955, %v1954
      %v1998 = vpack.c.b16 %v1957, %v1956
      %v1999 = vpack.c.b16 %v1959, %v1958
      %v2000 = vpack.c.b16 %v1961, %v1960
      %v2001 = vpack.c.b16 %v1963, %v1962
      %v2002 = vpack.c.b16 %v1965, %v1964
      %v2003 = vpack.c.b16 %v1967, %v1966
      %v2004 = vpack.c.b16 %v1969, %v1968
      %v2005 = vpack.c.b16 %v1971, %v1970
      %v2006 = vpack.c.b16 %v1973, %v1972
      %v2007 = vpack.c.b16 %v1975, %v1974
      %v2008 = vpack.c.b16 %v1977, %v1976
      %v2009 = vpack.c.b16 %v1979, %v1978
      %v2010 = vpack.c.b16 %v1981, %v1980
      %v2011 = vpack.c.b16 %v1983, %v1982
      %v2012 = vpack.c.b16 %v1985, %v1984
      %v2013 = vpack.c.b16 %v1987, %v1986
      %v2014 = vpack.c.b16 %v1989, %v1988
      %v2015 = vpack.c.b16 %v1991, %v1990
      %2040 = vmatprep.subr.bf16.mxu0 0
      %2041 = vmatpush1.bf16.msra.mxu0 %v1992
      %2042 = vmatprep.subr.bf16.mxu0 0
      %2043 = vmatpush1.bf16.msra.mxu0 %v1993
      %2044 = vmatprep.subr.bf16.mxu0 0
      %2045 = vmatpush1.bf16.msra.mxu0 %v1994
      %2046 = vmatprep.subr.bf16.mxu0 0
      %2047 = vmatpush1.bf16.msra.mxu0 %v1995
      %2048 = vmatprep.subr.bf16.mxu0 0
      %2049 = vmatpush1.bf16.msra.mxu0 %v1996
      %2050 = vmatprep.subr.bf16.mxu0 0
      %2051 = vmatpush1.bf16.msra.mxu0 %v1997
      %2052 = vmatprep.subr.bf16.mxu0 0
      %2053 = vmatpush1.bf16.msra.mxu0 %v1998
      %2054 = vmatprep.subr.bf16.mxu0 0
      %2055 = vmatpush1.bf16.msra.mxu0 %v1999
      %2056 = vmatprep.subr.bf16.mxu0 0
      %2057 = vmatpush1.bf16.msra.mxu0 %v2000
      %2058 = vmatprep.subr.bf16.mxu0 0
      %2059 = vmatpush1.bf16.msra.mxu0 %v2001
      %2060 = vmatprep.subr.bf16.mxu0 0
      %2061 = vmatpush1.bf16.msra.mxu0 %v2002
      %2062 = vmatprep.subr.bf16.mxu0 0
      %2063 = vmatpush1.bf16.msra.mxu0 %v2003
      %2064 = vmatprep.subr.bf16.mxu0 0
      %2065 = vmatpush1.bf16.msra.mxu0 %v2004
      %2066 = vmatprep.subr.bf16.mxu0 0
      %2067 = vmatpush1.bf16.msra.mxu0 %v2005
      %2068 = vmatprep.subr.bf16.mxu0 0
      %2069 = vmatpush1.bf16.msra.mxu0 %v2006
      %2070 = vmatprep.subr.bf16.mxu0 0
      %2071 = vmatpush1.bf16.msra.mxu0 %v2007
      %2072 = vmatprep.mubr.bf16.mxu0 %v1780
      %2073 = vmatmul.mubr.bf16.gmra.mrb[0].mxu0 %v1777
      %v2074 = vpop.f32.mrb[0].mxu0
      %v2075 = vadd.f32 0.0, %v2074
      %v2076 = vpop.f32.mrb[0].mxu0
      %v2077 = vpop.f32.mrb[0].mxu0
      %v2078 = vadd.f32 0.0, %v2077
      %v2079 = vpop.f32.mrb[0].mxu0
      %2080 = vmatprep.mubr.bf16.mxu0 %v1783
      %2081 = vmatmul.mubr.bf16.gmra.mrb[0].mxu0 %v1780
      %v2082 = vpop.f32.mrb[0].mxu0
      %v2083 = vadd.f32 0.0, %v2082
      %v2084 = vpop.f32.mrb[0].mxu0
      %v2085 = vpop.f32.mrb[0].mxu0
      %v2086 = vadd.f32 0.0, %v2085
      %v2087 = vpop.f32.mrb[0].mxu0
      %2088 = vmatprep.mubr.bf16.mxu0 %v1786
      %2089 = vmatmul.mubr.bf16.gmra.mrb[0].mxu0 %v1783
      %v2090 = vpop.f32.mrb[0].mxu0
      %v2091 = vadd.f32 0.0, %v2090
      %v2092 = vpop.f32.mrb[0].mxu0
      %v2093 = vpop.f32.mrb[0].mxu0
      %v2094 = vadd.f32 0.0, %v2093
      %v2095 = vpop.f32.mrb[0].mxu0
      %2096 = vmatprep.mubr.bf16.mxu0 %v1789
      %2097 = vmatmul.mubr.bf16.gmra.mrb[0].mxu0 %v1786
      %v2098 = vpop.f32.mrb[0].mxu0
      %v2099 = vadd.f32 0.0, %v2098
      %v2100 = vpop.f32.mrb[0].mxu0
      %v2101 = vpop.f32.mrb[0].mxu0
      %v2102 = vadd.f32 0.0, %v2101
      %v2103 = vpop.f32.mrb[0].mxu0
      %2104 = vmatprep.mubr.bf16.mxu0 %v1792
      %2105 = vmatmul.mubr.bf16.gmra.mrb[0].mxu0 %v1789
      %v2106 = vpop.f32.mrb[0].mxu0
      %v2107 = vadd.f32 0.0, %v2106
      %v2108 = vpop.f32.mrb[0].mxu0
      %v2109 = vpop.f32.mrb[0].mxu0
      %v2110 = vadd.f32 0.0, %v2109
      %v2111 = vpop.f32.mrb[0].mxu0
      %2112 = vmatprep.mubr.bf16.mxu0 %v1795
      %2113 = vmatmul.mubr.bf16.gmra.mrb[0].mxu0 %v1792
      %v2114 = vpop.f32.mrb[0].mxu0
      %v2115 = vadd.f32 0.0, %v2114
      %v2116 = vpop.f32.mrb[0].mxu0
      %v2117 = vpop.f32.mrb[0].mxu0
      %v2118 = vadd.f32 0.0, %v2117
      %v2119 = vpop.f32.mrb[0].mxu0
      %2120 = vmatprep.mubr.bf16.mxu0 %v1798
      %2121 = vmatmul.mubr.bf16.gmra.mrb[0].mxu0 %v1795
      %v2122 = vpop.f32.mrb[0].mxu0
      %v2123 = vadd.f32 0.0, %v2122
      %v2124 = vpop.f32.mrb[0].mxu0
      %v2125 = vpop.f32.mrb[0].mxu0
      %v2126 = vadd.f32 0.0, %v2125
      %v2127 = vpop.f32.mrb[0].mxu0
      %2128 = vmatprep.mubr.bf16.mxu0 %v1801
      %2129 = vmatmul.mubr.bf16.gmra.mrb[0].mxu0 %v1798
      %v2130 = vpop.f32.mrb[0].mxu0
      %v2131 = vadd.f32 0.0, %v2130
      %v2132 = vpop.f32.mrb[0].mxu0
      %v2133 = vpop.f32.mrb[0].mxu0
      %v2134 = vadd.f32 0.0, %v2133
      %v2135 = vpop.f32.mrb[0].mxu0
      %2136 = vmatprep.mubr.bf16.mxu0 %v1804
      %2137 = vmatmul.mubr.bf16.gmra.mrb[0].mxu0 %v1801
      %v2138 = vpop.f32.mrb[0].mxu0
      %v2139 = vadd.f32 0.0, %v2138
      %v2140 = vpop.f32.mrb[0].mxu0
      %v2141 = vpop.f32.mrb[0].mxu0
      %v2142 = vadd.f32 0.0, %v2141
      %v2143 = vpop.f32.mrb[0].mxu0
      %2144 = vmatprep.mubr.bf16.mxu0 %v1807
      %2145 = vmatmul.mubr.bf16.gmra.mrb[0].mxu0 %v1804
      %v2146 = vpop.f32.mrb[0].mxu0
      %v2147 = vadd.f32 0.0, %v2146
      %v2148 = vpop.f32.mrb[0].mxu0
      %v2149 = vpop.f32.mrb[0].mxu0
      %v2150 = vadd.f32 0.0, %v2149
      %v2151 = vpop.f32.mrb[0].mxu0
      %2152 = vmatprep.mubr.bf16.mxu0 %v1810
      %2153 = vmatmul.mubr.bf16.gmra.mrb[0].mxu0 %v1807
      %v2154 = vpop.f32.mrb[0].mxu0
      %v2155 = vadd.f32 0.0, %v2154
      %v2156 = vpop.f32.mrb[0].mxu0
      %v2157 = vpop.f32.mrb[0].mxu0
      %v2158 = vadd.f32 0.0, %v2157
      %v2159 = vpop.f32.mrb[0].mxu0
      %2160 = vmatprep.mubr.bf16.mxu0 %v1813
      %2161 = vmatmul.mubr.bf16.gmra.mrb[0].mxu0 %v1810
      %v2162 = vpop.f32.mrb[0].mxu0
      %v2163 = vadd.f32 0.0, %v2162
      %v2164 = vpop.f32.mrb[0].mxu0
      %v2165 = vpop.f32.mrb[0].mxu0
      %v2166 = vadd.f32 0.0, %v2165
      %v2167 = vpop.f32.mrb[0].mxu0
      %2168 = vmatprep.mubr.bf16.mxu0 %v1816
      %2169 = vmatmul.mubr.bf16.gmra.mrb[0].mxu0 %v1813
      %v2170 = vpop.f32.mrb[0].mxu0
      %v2171 = vadd.f32 0.0, %v2170
      %v2172 = vpop.f32.mrb[0].mxu0
      %v2173 = vpop.f32.mrb[0].mxu0
      %v2174 = vadd.f32 0.0, %v2173
      %v2175 = vpop.f32.mrb[0].mxu0
      %2176 = vmatprep.mubr.bf16.mxu0 %v1819
      %2177 = vmatmul.mubr.bf16.gmra.mrb[0].mxu0 %v1816
      %v2178 = vpop.f32.mrb[0].mxu0
      %v2179 = vadd.f32 0.0, %v2178
      %v2180 = vpop.f32.mrb[0].mxu0
      %v2181 = vpop.f32.mrb[0].mxu0
      %v2182 = vadd.f32 0.0, %v2181
      %v2183 = vpop.f32.mrb[0].mxu0
      %2184 = vmatprep.mubr.bf16.mxu0 %v1822
      %2185 = vmatmul.mubr.bf16.gmra.mrb[0].mxu0 %v1819
      %v2186 = vpop.f32.mrb[0].mxu0
      %v2187 = vadd.f32 0.0, %v2186
      %v2188 = vpop.f32.mrb[0].mxu0
      %v2189 = vpop.f32.mrb[0].mxu0
      %v2190 = vadd.f32 0.0, %v2189
      %v2191 = vpop.f32.mrb[0].mxu0
      %2192 = vmatprep.mubr.bf16.mxu0 %v1825
      %2193 = vmatmul.mubr.bf16.gmra.mrb[0].mxu0 %v1822
      %v2194 = vpop.f32.mrb[0].mxu0
      %v2195 = vadd.f32 0.0, %v2194
      %v2196 = vpop.f32.mrb[0].mxu0
      %v2197 = vpop.f32.mrb[0].mxu0
      %v2198 = vadd.f32 0.0, %v2197
      %v2199 = vpop.f32.mrb[0].mxu0
      %2200 = vdwg.mxu0
      %2201 = vmatprep.subr.bf16.mxu0 0
      %2202 = vmatpush1.bf16.msra.mxu0 %v2008
      %2203 = vmatprep.subr.bf16.mxu0 0
      %2204 = vmatpush1.bf16.msra.mxu0 %v2009
      %2205 = vmatprep.subr.bf16.mxu0 0
      %2206 = vmatpush1.bf16.msra.mxu0 %v2010
      %2207 = vmatprep.subr.bf16.mxu0 0
      %2208 = vmatpush1.bf16.msra.mxu0 %v2011
      %2209 = vmatprep.subr.bf16.mxu0 0
      %2210 = vmatpush1.bf16.msra.mxu0 %v2012
      %2211 = vmatprep.subr.bf16.mxu0 0
      %2212 = vmatpush1.bf16.msra.mxu0 %v2013
      %2213 = vmatprep.subr.bf16.mxu0 0
      %2214 = vmatpush1.bf16.msra.mxu0 %v2014
      %2215 = vmatprep.subr.bf16.mxu0 0
      %2216 = vmatpush1.bf16.msra.mxu0 %v2015
      %2217 = vmatprep.subr.bf16.mxu0 0
      %2218 = vmatpush1.bf16.msra.mxu0 0
      %2219 = vmatprep.subr.bf16.mxu0 0
      %2220 = vmatpush1.bf16.msra.mxu0 0
      %2221 = vmatprep.subr.bf16.mxu0 0
      %2222 = vmatpush1.bf16.msra.mxu0 0
      %2223 = vmatprep.subr.bf16.mxu0 0
      %2224 = vmatpush1.bf16.msra.mxu0 0
      %2225 = vmatprep.subr.bf16.mxu0 0
      %2226 = vmatpush1.bf16.msra.mxu0 0
      %2227 = vmatprep.subr.bf16.mxu0 0
      %2228 = vmatpush1.bf16.msra.mxu0 0
      %2229 = vmatprep.subr.bf16.mxu0 0
      %2230 = vmatpush1.bf16.msra.mxu0 0
      %2231 = vmatprep.subr.bf16.mxu0 0
      %2232 = vmatpush1.bf16.msra.mxu0 0
      %2233 = vmatprep.mubr.bf16.mxu0 0
      %2234 = vmatmul.mubr.bf16.gmra.mrb[0].mxu0 %v1783
      %v2235 = vpop.f32.mrb[0].mxu0
      %v2236 = vadd.f32 %v2075, %v2235
      %v2237 = vpop.f32.mrb[0].mxu0
      %v2238 = vpop.f32.mrb[0].mxu0
      %v2239 = vadd.f32 %v2078, %v2238
      %v2240 = vpop.f32.mrb[0].mxu0
      %2241 = vmatprep.mubr.bf16.mxu0 0
      %2242 = vmatmul.mubr.bf16.gmra.mrb[0].mxu0 %v1786
      %v2243 = vpop.f32.mrb[0].mxu0
      %v2244 = vadd.f32 %v2083, %v2243
      %v2245 = vpop.f32.mrb[0].mxu0
      %v2246 = vpop.f32.mrb[0].mxu0
      %v2247 = vadd.f32 %v2086, %v2246
      %v2248 = vpop.f32.mrb[0].mxu0
      %2249 = vmatprep.mubr.bf16.mxu0 0
      %2250 = vmatmul.mubr.bf16.gmra.mrb[0].mxu0 %v1789
      %v2251 = vpop.f32.mrb[0].mxu0
      %v2252 = vadd.f32 %v2091, %v2251
      %v2253 = vpop.f32.mrb[0].mxu0
      %v2254 = vpop.f32.mrb[0].mxu0
      %v2255 = vadd.f32 %v2094, %v2254
      %v2256 = vpop.f32.mrb[0].mxu0
      %2257 = vmatprep.mubr.bf16.mxu0 0
      %2258 = vmatmul.mubr.bf16.gmra.mrb[0].mxu0 %v1792
      %v2259 = vpop.f32.mrb[0].mxu0
      %v2260 = vadd.f32 %v2099, %v2259
      %v2261 = vpop.f32.mrb[0].mxu0
      %v2262 = vpop.f32.mrb[0].mxu0
      %v2263 = vadd.f32 %v2102, %v2262
      %v2264 = vpop.f32.mrb[0].mxu0
      %2265 = vmatprep.mubr.bf16.mxu0 0
      %2266 = vmatmul.mubr.bf16.gmra.mrb[0].mxu0 %v1795
      %v2267 = vpop.f32.mrb[0].mxu0
      %v2268 = vadd.f32 %v2107, %v2267
      %v2269 = vpop.f32.mrb[0].mxu0
      %v2270 = vpop.f32.mrb[0].mxu0
      %v2271 = vadd.f32 %v2110, %v2270
      %v2272 = vpop.f32.mrb[0].mxu0
      %2273 = vmatprep.mubr.bf16.mxu0 0
      %2274 = vmatmul.mubr.bf16.gmra.mrb[0].mxu0 %v1798
      %v2275 = vpop.f32.mrb[0].mxu0
      %v2276 = vadd.f32 %v2115, %v2275
      %v2277 = vpop.f32.mrb[0].mxu0
      %v2278 = vpop.f32.mrb[0].mxu0
      %v2279 = vadd.f32 %v2118, %v2278
      %v2280 = vpop.f32.mrb[0].mxu0
      %2281 = vmatprep.mubr.bf16.mxu0 0
      %2282 = vmatmul.mubr.bf16.gmra.mrb[0].mxu0 %v1801
      %v2283 = vpop.f32.mrb[0].mxu0
      %v2284 = vadd.f32 %v2123, %v2283
      %v2285 = vpop.f32.mrb[0].mxu0
      %v2286 = vpop.f32.mrb[0].mxu0
      %v2287 = vadd.f32 %v2126, %v2286
      %v2288 = vpop.f32.mrb[0].mxu0
      %2289 = vmatprep.mubr.bf16.mxu0 0
      %2290 = vmatmul.mubr.bf16.gmra.mrb[0].mxu0 %v1804
      %v2291 = vpop.f32.mrb[0].mxu0
      %v2292 = vadd.f32 %v2131, %v2291
      %v2293 = vpop.f32.mrb[0].mxu0
      %v2294 = vpop.f32.mrb[0].mxu0
      %v2295 = vadd.f32 %v2134, %v2294
      %v2296 = vpop.f32.mrb[0].mxu0
      %2297 = vmatprep.mubr.bf16.mxu0 0
      %2298 = vmatmul.mubr.bf16.gmra.mrb[0].mxu0 %v1807
      %v2299 = vpop.f32.mrb[0].mxu0
      %v2300 = vadd.f32 %v2139, %v2299
      %v2301 = vpop.f32.mrb[0].mxu0
      %v2302 = vpop.f32.mrb[0].mxu0
      %v2303 = vadd.f32 %v2142, %v2302
      %v2304 = vpop.f32.mrb[0].mxu0
      %2305 = vmatprep.mubr.bf16.mxu0 0
      %2306 = vmatmul.mubr.bf16.gmra.mrb[0].mxu0 %v1810
      %v2307 = vpop.f32.mrb[0].mxu0
      %v2308 = vadd.f32 %v2147, %v2307
      %v2309 = vpop.f32.mrb[0].mxu0
      %v2310 = vpop.f32.mrb[0].mxu0
      %v2311 = vadd.f32 %v2150, %v2310
      %v2312 = vpop.f32.mrb[0].mxu0
      %2313 = vmatprep.mubr.bf16.mxu0 0
      %2314 = vmatmul.mubr.bf16.gmra.mrb[0].mxu0 %v1813
      %v2315 = vpop.f32.mrb[0].mxu0
      %v2316 = vadd.f32 %v2155, %v2315
      %v2317 = vpop.f32.mrb[0].mxu0
      %v2318 = vpop.f32.mrb[0].mxu0
      %v2319 = vadd.f32 %v2158, %v2318
      %v2320 = vpop.f32.mrb[0].mxu0
      %2321 = vmatprep.mubr.bf16.mxu0 0
      %2322 = vmatmul.mubr.bf16.gmra.mrb[0].mxu0 %v1816
      %v2323 = vpop.f32.mrb[0].mxu0
      %v2324 = vadd.f32 %v2163, %v2323
      %v2325 = vpop.f32.mrb[0].mxu0
      %v2326 = vpop.f32.mrb[0].mxu0
      %v2327 = vadd.f32 %v2166, %v2326
      %v2328 = vpop.f32.mrb[0].mxu0
      %2329 = vmatprep.mubr.bf16.mxu0 0
      %2330 = vmatmul.mubr.bf16.gmra.mrb[0].mxu0 %v1819
      %v2331 = vpop.f32.mrb[0].mxu0
      %v2332 = vadd.f32 %v2171, %v2331
      %v2333 = vpop.f32.mrb[0].mxu0
      %v2334 = vpop.f32.mrb[0].mxu0
      %v2335 = vadd.f32 %v2174, %v2334
      %v2336 = vpop.f32.mrb[0].mxu0
      %2337 = vmatprep.mubr.bf16.mxu0 0
      %2338 = vmatmul.mubr.bf16.gmra.mrb[0].mxu0 %v1822
      %v2339 = vpop.f32.mrb[0].mxu0
      %v2340 = vadd.f32 %v2179, %v2339
      %v2341 = vpop.f32.mrb[0].mxu0
      %v2342 = vpop.f32.mrb[0].mxu0
      %v2343 = vadd.f32 %v2182, %v2342
      %v2344 = vpop.f32.mrb[0].mxu0
      %2345 = vmatprep.mubr.bf16.mxu0 0
      %2346 = vmatmul.mubr.bf16.gmra.mrb[0].mxu0 %v1825
      %v2347 = vpop.f32.mrb[0].mxu0
      %v2348 = vadd.f32 %v2187, %v2347
      %v2349 = vpop.f32.mrb[0].mxu0
      %v2350 = vpop.f32.mrb[0].mxu0
      %v2351 = vadd.f32 %v2190, %v2350
      %v2352 = vpop.f32.mrb[0].mxu0
      %2353 = vmatprep.mubr.bf16.mxu0 0
      %2354 = vmatmul.mubr.bf16.gmra.mrb[0].mxu0 %v1828
      %v2355 = vpop.f32.mrb[0].mxu0
      %v2356 = vadd.f32 %v2195, %v2355
      %v2357 = vpop.f32.mrb[0].mxu0
      %v2358 = vpop.f32.mrb[0].mxu0
      %v2359 = vadd.f32 %v2198, %v2358
      %v2360 = vpop.f32.mrb[0].mxu0
      %2361 = vdwg.mxu0
      %v2362 = vadd.f32 %v1648, %v2236
      %v2363 = vadd.f32 %v1651, %v2239
      %v2364 = vadd.f32 %v1656, %v2244
      %v2365 = vadd.f32 %v1659, %v2247
      %v2366 = vadd.f32 %v1664, %v2252
      %v2367 = vadd.f32 %v1667, %v2255
      %v2368 = vadd.f32 %v1672, %v2260
      %v2369 = vadd.f32 %v1675, %v2263
      %v2370 = vadd.f32 %v1680, %v2268
      %v2371 = vadd.f32 %v1683, %v2271
      %v2372 = vadd.f32 %v1688, %v2276
      %v2373 = vadd.f32 %v1691, %v2279
      %v2374 = vadd.f32 %v1696, %v2284
      %v2375 = vadd.f32 %v1699, %v2287
      %v2376 = vadd.f32 %v1704, %v2292
      %v2377 = vadd.f32 %v1707, %v2295
      %v2378 = vadd.f32 %v1712, %v2300
      %v2379 = vadd.f32 %v1715, %v2303
      %v2380 = vadd.f32 %v1720, %v2308
      %v2381 = vadd.f32 %v1723, %v2311
      %v2382 = vadd.f32 %v1728, %v2316
      %v2383 = vadd.f32 %v1731, %v2319
      %v2384 = vadd.f32 %v1736, %v2324
      %v2385 = vadd.f32 %v1739, %v2327
      %v2386 = vadd.f32 %v1744, %v2332
      %v2387 = vadd.f32 %v1747, %v2335
      %v2388 = vadd.f32 %v1752, %v2340
      %v2389 = vadd.f32 %v1755, %v2343
      %v2390 = vadd.f32 %v1760, %v2348
      %v2391 = vadd.f32 %v1763, %v2351
      %v2392 = vadd.f32 %v1768, %v2356
      %v2393 = vadd.f32 %v1771, %v2359
      %vm2394 = vsmask.f32 3328
      %vm2395 = vsmask.f32 7440
      %vm2396 = vmor %vm2394, %vm2395
      %v2398 = vshrl.u32 %v297, 16
      %v2400 = vrot.slane %v2398, 4
      %v2401 = vshll.u32 %v297, 16
      %v2403 = vrot.slane %v2401, 5
      %v2404 = vor.u32 %v2400, %v2403
      %v2405 = vrot.slane %v2404, 4
      %v2407 = vshll.u32 %v298, 16
      %v2409 = vrot.slane %v2407, 5
      %v2410 = vsel %vm2396, %v2405, %v2409
      %v2411 = vshrl.u32 %v298, 16
      %v2413 = vrot.slane %v2411, 4
      %v2414 = vor.u32 %v2413, %v2409
      %v2415 = vrot.slane %v2414, 4
      %v2417 = vshll.u32 %v299, 16
      %v2419 = vrot.slane %v2417, 5
      %v2420 = vsel %vm2396, %v2415, %v2419
      %v2422 = vshrl.u32 %v300, 16
      %v2424 = vrot.slane %v2422, 4
      %v2425 = vshll.u32 %v300, 16
      %v2427 = vrot.slane %v2425, 5
      %v2428 = vor.u32 %v2424, %v2427
      %v2429 = vrot.slane %v2428, 4
      %v2431 = vshll.u32 %v301, 16
      %v2433 = vrot.slane %v2431, 5
      %v2434 = vsel %vm2396, %v2429, %v2433
      %v2435 = vshrl.u32 %v301, 16
      %v2437 = vrot.slane %v2435, 4
      %v2438 = vor.u32 %v2437, %v2433
      %v2439 = vrot.slane %v2438, 4
      %v2441 = vshll.u32 %v302, 16
      %v2443 = vrot.slane %v2441, 5
      %v2444 = vsel %vm2396, %v2439, %v2443
      %v2446 = vshrl.u32 %v303, 16
      %v2448 = vrot.slane %v2446, 4
      %v2449 = vshll.u32 %v303, 16
      %v2451 = vrot.slane %v2449, 5
      %v2452 = vor.u32 %v2448, %v2451
      %v2453 = vrot.slane %v2452, 4
      %v2455 = vshll.u32 %v304, 16
      %v2457 = vrot.slane %v2455, 5
      %v2458 = vsel %vm2396, %v2453, %v2457
      %v2459 = vshrl.u32 %v304, 16
      %v2461 = vrot.slane %v2459, 4
      %v2462 = vor.u32 %v2461, %v2457
      %v2463 = vrot.slane %v2462, 4
      %v2465 = vshll.u32 %v305, 16
      %v2467 = vrot.slane %v2465, 5
      %v2468 = vsel %vm2396, %v2463, %v2467
      %v2470 = vshrl.u32 %v306, 16
      %v2472 = vrot.slane %v2470, 4
      %v2473 = vshll.u32 %v306, 16
      %v2475 = vrot.slane %v2473, 5
      %v2476 = vor.u32 %v2472, %v2475
      %v2477 = vrot.slane %v2476, 4
      %v2479 = vshll.u32 %v307, 16
      %v2481 = vrot.slane %v2479, 5
      %v2482 = vsel %vm2396, %v2477, %v2481
      %v2483 = vshrl.u32 %v307, 16
      %v2485 = vrot.slane %v2483, 4
      %v2486 = vor.u32 %v2485, %v2481
      %v2487 = vrot.slane %v2486, 4
      %v2489 = vshll.u32 %v308, 16
      %v2491 = vrot.slane %v2489, 5
      %v2492 = vsel %vm2396, %v2487, %v2491
      %v2494 = vshrl.u32 %v309, 16
      %v2496 = vrot.slane %v2494, 4
      %v2497 = vshll.u32 %v309, 16
      %v2499 = vrot.slane %v2497, 5
      %v2500 = vor.u32 %v2496, %v2499
      %v2501 = vrot.slane %v2500, 4
      %v2503 = vshll.u32 %v310, 16
      %v2505 = vrot.slane %v2503, 5
      %v2506 = vsel %vm2396, %v2501, %v2505
      %v2507 = vshrl.u32 %v310, 16
      %v2509 = vrot.slane %v2507, 4
      %v2510 = vor.u32 %v2509, %v2505
      %v2511 = vrot.slane %v2510, 4
      %v2513 = vshll.u32 %v311, 16
      %v2515 = vrot.slane %v2513, 5
      %v2516 = vsel %vm2396, %v2511, %v2515
      %v2518 = vshrl.u32 %v312, 16
      %v2520 = vrot.slane %v2518, 4
      %v2521 = vshll.u32 %v312, 16
      %v2523 = vrot.slane %v2521, 5
      %v2524 = vor.u32 %v2520, %v2523
      %v2525 = vrot.slane %v2524, 4
      %v2527 = vshll.u32 %v313, 16
      %v2529 = vrot.slane %v2527, 5
      %v2530 = vsel %vm2396, %v2525, %v2529
      %v2531 = vshrl.u32 %v313, 16
      %v2533 = vrot.slane %v2531, 4
      %v2534 = vor.u32 %v2533, %v2529
      %v2535 = vrot.slane %v2534, 4
      %v2537 = vshll.u32 %v314, 16
      %v2539 = vrot.slane %v2537, 5
      %v2540 = vsel %vm2396, %v2535, %v2539
      %v2542 = vshrl.u32 %v315, 16
      %v2544 = vrot.slane %v2542, 4
      %v2545 = vshll.u32 %v315, 16
      %v2547 = vrot.slane %v2545, 5
      %v2548 = vor.u32 %v2544, %v2547
      %v2549 = vrot.slane %v2548, 4
      %v2551 = vshll.u32 %v316, 16
      %v2553 = vrot.slane %v2551, 5
      %v2554 = vsel %vm2396, %v2549, %v2553
      %v2555 = vshrl.u32 %v316, 16
      %v2557 = vrot.slane %v2555, 4
      %v2558 = vor.u32 %v2557, %v2553
      %v2559 = vrot.slane %v2558, 4
      %v2561 = vshll.u32 %v317, 16
      %v2563 = vrot.slane %v2561, 5
      %v2564 = vsel %vm2396, %v2559, %v2563
      %v2566 = vshrl.u32 %v318, 16
      %v2568 = vrot.slane %v2566, 4
      %v2569 = vshll.u32 %v318, 16
      %v2571 = vrot.slane %v2569, 5
      %v2572 = vor.u32 %v2568, %v2571
      %v2573 = vrot.slane %v2572, 4
      %v2575 = vshll.u32 %v319, 16
      %v2577 = vrot.slane %v2575, 5
      %v2578 = vsel %vm2396, %v2573, %v2577
      %v2579 = vshrl.u32 %v319, 16
      %v2581 = vrot.slane %v2579, 4
      %v2582 = vor.u32 %v2581, %v2577
      %v2583 = vrot.slane %v2582, 4
      %v2585 = vshll.u32 %v320, 16
      %v2587 = vrot.slane %v2585, 5
      %v2588 = vsel %vm2396, %v2583, %v2587
      %v2590 = vshrl.u32 %v321, 16
      %v2592 = vrot.slane %v2590, 4
      %v2593 = vshll.u32 %v321, 16
      %v2595 = vrot.slane %v2593, 5
      %v2596 = vor.u32 %v2592, %v2595
      %v2597 = vrot.slane %v2596, 4
      %v2599 = vshll.u32 %v322, 16
      %v2601 = vrot.slane %v2599, 5
      %v2602 = vsel %vm2396, %v2597, %v2601
      %v2603 = vshrl.u32 %v322, 16
      %v2605 = vrot.slane %v2603, 4
      %v2606 = vor.u32 %v2605, %v2601
      %v2607 = vrot.slane %v2606, 4
      %v2609 = vshll.u32 %v323, 16
      %v2611 = vrot.slane %v2609, 5
      %v2612 = vsel %vm2396, %v2607, %v2611
      %v2614 = vshrl.u32 %v324, 16
      %v2616 = vrot.slane %v2614, 4
      %v2617 = vshll.u32 %v324, 16
      %v2619 = vrot.slane %v2617, 5
      %v2620 = vor.u32 %v2616, %v2619
      %v2621 = vrot.slane %v2620, 4
      %v2623 = vshll.u32 %v325, 16
      %v2625 = vrot.slane %v2623, 5
      %v2626 = vsel %vm2396, %v2621, %v2625
      %v2627 = vshrl.u32 %v325, 16
      %v2629 = vrot.slane %v2627, 4
      %v2630 = vor.u32 %v2629, %v2625
      %v2631 = vrot.slane %v2630, 4
      %v2633 = vshll.u32 %v326, 16
      %v2635 = vrot.slane %v2633, 5
      %v2636 = vsel %vm2396, %v2631, %v2635
      %v2638 = vshrl.u32 %v327, 16
      %v2640 = vrot.slane %v2638, 4
      %v2641 = vshll.u32 %v327, 16
      %v2643 = vrot.slane %v2641, 5
      %v2644 = vor.u32 %v2640, %v2643
      %v2645 = vrot.slane %v2644, 4
      %v2647 = vshll.u32 %v328, 16
      %v2649 = vrot.slane %v2647, 5
      %v2650 = vsel %vm2396, %v2645, %v2649
      %v2651 = vshrl.u32 %v328, 16
      %v2653 = vrot.slane %v2651, 4
      %v2654 = vor.u32 %v2653, %v2649
      %v2655 = vrot.slane %v2654, 4
      %v2657 = vshll.u32 %v329, 16
      %v2659 = vrot.slane %v2657, 5
      %v2660 = vsel %vm2396, %v2655, %v2659
      %v2662 = vshrl.u32 %v330, 16
      %v2664 = vrot.slane %v2662, 4
      %v2665 = vshll.u32 %v330, 16
      %v2667 = vrot.slane %v2665, 5
      %v2668 = vor.u32 %v2664, %v2667
      %v2669 = vrot.slane %v2668, 4
      %v2671 = vshll.u32 %v331, 16
      %v2673 = vrot.slane %v2671, 5
      %v2674 = vsel %vm2396, %v2669, %v2673
      %v2675 = vshrl.u32 %v331, 16
      %v2677 = vrot.slane %v2675, 4
      %v2678 = vor.u32 %v2677, %v2673
      %v2679 = vrot.slane %v2678, 4
      %v2681 = vshll.u32 %v332, 16
      %v2683 = vrot.slane %v2681, 5
      %v2684 = vsel %vm2396, %v2679, %v2683
      %v2686 = vshrl.u32 %v333, 16
      %v2688 = vrot.slane %v2686, 4
      %v2689 = vshll.u32 %v333, 16
      %v2691 = vrot.slane %v2689, 5
      %v2692 = vor.u32 %v2688, %v2691
      %v2693 = vrot.slane %v2692, 4
      %v2695 = vshll.u32 %v334, 16
      %v2697 = vrot.slane %v2695, 5
      %v2698 = vsel %vm2396, %v2693, %v2697
      %v2699 = vshrl.u32 %v334, 16
      %v2701 = vrot.slane %v2699, 4
      %v2702 = vor.u32 %v2701, %v2697
      %v2703 = vrot.slane %v2702, 4
      %v2705 = vshll.u32 %v335, 16
      %v2707 = vrot.slane %v2705, 5
      %v2708 = vsel %vm2396, %v2703, %v2707
      %v2710 = vshrl.u32 %v336, 16
      %v2712 = vrot.slane %v2710, 4
      %v2713 = vshll.u32 %v336, 16
      %v2715 = vrot.slane %v2713, 5
      %v2716 = vor.u32 %v2712, %v2715
      %v2717 = vrot.slane %v2716, 4
      %v2719 = vshll.u32 %v337, 16
      %v2721 = vrot.slane %v2719, 5
      %v2722 = vsel %vm2396, %v2717, %v2721
      %v2723 = vshrl.u32 %v337, 16
      %v2725 = vrot.slane %v2723, 4
      %v2726 = vor.u32 %v2725, %v2721
      %v2727 = vrot.slane %v2726, 4
      %v2729 = vshll.u32 %v338, 16
      %v2731 = vrot.slane %v2729, 5
      %v2732 = vsel %vm2396, %v2727, %v2731
      %v2734 = vshrl.u32 %v339, 16
      %v2736 = vrot.slane %v2734, 4
      %v2737 = vshll.u32 %v339, 16
      %v2739 = vrot.slane %v2737, 5
      %v2740 = vor.u32 %v2736, %v2739
      %v2741 = vrot.slane %v2740, 4
      %v2743 = vshll.u32 %v340, 16
      %v2745 = vrot.slane %v2743, 5
      %v2746 = vsel %vm2396, %v2741, %v2745
      %v2747 = vshrl.u32 %v340, 16
      %v2749 = vrot.slane %v2747, 4
      %v2750 = vor.u32 %v2749, %v2745
      %v2751 = vrot.slane %v2750, 4
      %v2753 = vshll.u32 %v341, 16
      %v2755 = vrot.slane %v2753, 5
      %v2756 = vsel %vm2396, %v2751, %v2755
      %v2758 = vshrl.u32 %v342, 16
      %v2760 = vrot.slane %v2758, 4
      %v2761 = vshll.u32 %v342, 16
      %v2763 = vrot.slane %v2761, 5
      %v2764 = vor.u32 %v2760, %v2763
      %v2765 = vrot.slane %v2764, 4
      %v2767 = vshll.u32 %v343, 16
      %v2769 = vrot.slane %v2767, 5
      %v2770 = vsel %vm2396, %v2765, %v2769
      %v2771 = vshrl.u32 %v343, 16
      %v2773 = vrot.slane %v2771, 4
      %v2774 = vor.u32 %v2773, %v2769
      %v2775 = vrot.slane %v2774, 4
      %v2777 = vshll.u32 %v344, 16
      %v2779 = vrot.slane %v2777, 5
      %v2780 = vsel %vm2396, %v2775, %v2779
      %v2813 = vunpack.c.l.bf16 %v2410
      %v2814 = vunpack.c.l.bf16 %v2420
      %v2815 = vunpack.c.l.bf16 %v2434
      %v2816 = vunpack.c.l.bf16 %v2444
      %v2817 = vunpack.c.l.bf16 %v2458
      %v2818 = vunpack.c.l.bf16 %v2468
      %v2819 = vunpack.c.l.bf16 %v2482
      %v2820 = vunpack.c.l.bf16 %v2492
      %v2821 = vunpack.c.l.bf16 %v2506
      %v2822 = vunpack.c.l.bf16 %v2516
      %v2823 = vunpack.c.l.bf16 %v2530
      %v2824 = vunpack.c.l.bf16 %v2540
      %v2825 = vunpack.c.l.bf16 %v2554
      %v2826 = vunpack.c.l.bf16 %v2564
      %v2827 = vunpack.c.l.bf16 %v2578
      %v2828 = vunpack.c.l.bf16 %v2588
      %v2829 = vunpack.c.l.bf16 %v2602
      %v2830 = vunpack.c.l.bf16 %v2612
      %v2831 = vunpack.c.l.bf16 %v2626
      %v2832 = vunpack.c.l.bf16 %v2636
      %v2833 = vunpack.c.l.bf16 %v2650
      %v2834 = vunpack.c.l.bf16 %v2660
      %v2835 = vunpack.c.l.bf16 %v2674
      %v2836 = vunpack.c.l.bf16 %v2684
      %v2837 = vunpack.c.l.bf16 %v2698
      %v2838 = vunpack.c.l.bf16 %v2708
      %v2839 = vunpack.c.l.bf16 %v2722
      %v2840 = vunpack.c.l.bf16 %v2732
      %v2841 = vunpack.c.l.bf16 %v2746
      %v2842 = vunpack.c.l.bf16 %v2756
      %v2843 = vunpack.c.l.bf16 %v2770
      %v2844 = vunpack.c.l.bf16 %v2780
      %v2845 = vld [vmem:[%s3] sm:$0x1]
      %v2847 = vlaneseq
      %v2848 = vshrl.u32 %v2847, 7
      %v2849 = vsub.s32 0, %v2848
      %v2850 = vrot.slane %v2845, %v2849
      %v2852 = vadd.f32 %v2362, %v2850
      %v2853 = vadd.f32 %v2363, %v2850
      %v2854 = vadd.f32 %v2364, %v2850
      %v2855 = vadd.f32 %v2365, %v2850
      %v2856 = vadd.f32 %v2366, %v2850
      %v2857 = vadd.f32 %v2367, %v2850
      %v2858 = vadd.f32 %v2368, %v2850
      %v2859 = vadd.f32 %v2369, %v2850
      %v2860 = vadd.f32 %v2370, %v2850
      %v2861 = vadd.f32 %v2371, %v2850
      %v2862 = vadd.f32 %v2372, %v2850
      %v2863 = vadd.f32 %v2373, %v2850
      %v2864 = vadd.f32 %v2374, %v2850
      %v2865 = vadd.f32 %v2375, %v2850
      %v2866 = vadd.f32 %v2376, %v2850
      %v2867 = vadd.f32 %v2377, %v2850
      %v2868 = vadd.f32 %v2378, %v2850
      %v2869 = vadd.f32 %v2379, %v2850
      %v2870 = vadd.f32 %v2380, %v2850
      %v2871 = vadd.f32 %v2381, %v2850
      %v2872 = vadd.f32 %v2382, %v2850
      %v2873 = vadd.f32 %v2383, %v2850
      %v2874 = vadd.f32 %v2384, %v2850
      %v2875 = vadd.f32 %v2385, %v2850
      %v2876 = vadd.f32 %v2386, %v2850
      %v2877 = vadd.f32 %v2387, %v2850
      %v2878 = vadd.f32 %v2388, %v2850
      %v2879 = vadd.f32 %v2389, %v2850
      %v2880 = vadd.f32 %v2390, %v2850
      %v2881 = vadd.f32 %v2391, %v2850
      %v2882 = vadd.f32 %v2392, %v2850
      %v2883 = vadd.f32 %v2393, %v2850
      %v2884 = vadd.f32 %v2852, %v2813
      %v2885 = vadd.f32 %v2853, %v2814
      %v2886 = vadd.f32 %v2854, %v2815
      %v2887 = vadd.f32 %v2855, %v2816
      %v2888 = vadd.f32 %v2856, %v2817
      %v2889 = vadd.f32 %v2857, %v2818
      %v2890 = vadd.f32 %v2858, %v2819
      %v2891 = vadd.f32 %v2859, %v2820
      %v2892 = vadd.f32 %v2860, %v2821
      %v2893 = vadd.f32 %v2861, %v2822
      %v2894 = vadd.f32 %v2862, %v2823
      %v2895 = vadd.f32 %v2863, %v2824
      %v2896 = vadd.f32 %v2864, %v2825
      %v2897 = vadd.f32 %v2865, %v2826
      %v2898 = vadd.f32 %v2866, %v2827
      %v2899 = vadd.f32 %v2867, %v2828
      %v2900 = vadd.f32 %v2868, %v2829
      %v2901 = vadd.f32 %v2869, %v2830
      %v2902 = vadd.f32 %v2870, %v2831
      %v2903 = vadd.f32 %v2871, %v2832
      %v2904 = vadd.f32 %v2872, %v2833
      %v2905 = vadd.f32 %v2873, %v2834
      %v2906 = vadd.f32 %v2874, %v2835
      %v2907 = vadd.f32 %v2875, %v2836
      %v2908 = vadd.f32 %v2876, %v2837
      %v2909 = vadd.f32 %v2877, %v2838
      %v2910 = vadd.f32 %v2878, %v2839
      %v2911 = vadd.f32 %v2879, %v2840
      %v2912 = vadd.f32 %v2880, %v2841
      %v2913 = vadd.f32 %v2881, %v2842
      %v2914 = vadd.f32 %v2882, %v2843
      %v2915 = vadd.f32 %v2883, %v2844
      %v2916 = vsub.f32 0.0, %v2884
      %v2917 = vsub.f32 0.0, %v2885
      %v2918 = vsub.f32 0.0, %v2886
      %v2919 = vsub.f32 0.0, %v2887
      %v2920 = vsub.f32 0.0, %v2888
      %v2921 = vsub.f32 0.0, %v2889
      %v2922 = vsub.f32 0.0, %v2890
      %v2923 = vsub.f32 0.0, %v2891
      %v2924 = vsub.f32 0.0, %v2892
      %v2925 = vsub.f32 0.0, %v2893
      %v2926 = vsub.f32 0.0, %v2894
      %v2927 = vsub.f32 0.0, %v2895
      %v2928 = vsub.f32 0.0, %v2896
      %v2929 = vsub.f32 0.0, %v2897
      %v2930 = vsub.f32 0.0, %v2898
      %v2931 = vsub.f32 0.0, %v2899
      %v2932 = vsub.f32 0.0, %v2900
      %v2933 = vsub.f32 0.0, %v2901
      %v2934 = vsub.f32 0.0, %v2902
      %v2935 = vsub.f32 0.0, %v2903
      %v2936 = vsub.f32 0.0, %v2904
      %v2937 = vsub.f32 0.0, %v2905
      %v2938 = vsub.f32 0.0, %v2906
      %v2939 = vsub.f32 0.0, %v2907
      %v2940 = vsub.f32 0.0, %v2908
      %v2941 = vsub.f32 0.0, %v2909
      %v2942 = vsub.f32 0.0, %v2910
      %v2943 = vsub.f32 0.0, %v2911
      %v2944 = vsub.f32 0.0, %v2912
      %v2945 = vsub.f32 0.0, %v2913
      %v2946 = vsub.f32 0.0, %v2914
      %v2947 = vsub.f32 0.0, %v2915
      %v2948 = vmin.f32 %v2916, 30.0
      %v2949 = vmin.f32 %v2917, 30.0
      %v2950 = vmin.f32 %v2918, 30.0
      %v2951 = vmin.f32 %v2919, 30.0
      %v2952 = vmin.f32 %v2920, 30.0
      %v2953 = vmin.f32 %v2921, 30.0
      %v2954 = vmin.f32 %v2922, 30.0
      %v2955 = vmin.f32 %v2923, 30.0
      %v2956 = vmin.f32 %v2924, 30.0
      %v2957 = vmin.f32 %v2925, 30.0
      %v2958 = vmin.f32 %v2926, 30.0
      %v2959 = vmin.f32 %v2927, 30.0
      %v2960 = vmin.f32 %v2928, 30.0
      %v2961 = vmin.f32 %v2929, 30.0
      %v2962 = vmin.f32 %v2930, 30.0
      %v2963 = vmin.f32 %v2931, 30.0
      %v2964 = vmin.f32 %v2932, 30.0
      %v2965 = vmin.f32 %v2933, 30.0
      %v2966 = vmin.f32 %v2934, 30.0
      %v2967 = vmin.f32 %v2935, 30.0
      %v2968 = vmin.f32 %v2936, 30.0
      %v2969 = vmin.f32 %v2937, 30.0
      %v2970 = vmin.f32 %v2938, 30.0
      %v2971 = vmin.f32 %v2939, 30.0
      %v2972 = vmin.f32 %v2940, 30.0
      %v2973 = vmin.f32 %v2941, 30.0
      %v2974 = vmin.f32 %v2942, 30.0
      %v2975 = vmin.f32 %v2943, 30.0
      %v2976 = vmin.f32 %v2944, 30.0
      %v2977 = vmin.f32 %v2945, 30.0
      %v2978 = vmin.f32 %v2946, 30.0
      %v2979 = vmin.f32 %v2947, 30.0
      %v2980 = vmul.f32 %v2948, 1.442695
      %v2981 = vpow.pop %v2980
      %v2982 = vmul.f32 %v2949, 1.442695
      %v2983 = vpow.pop %v2982
      %v2984 = vmul.f32 %v2950, 1.442695
      %v2985 = vpow.pop %v2984
      %v2986 = vmul.f32 %v2951, 1.442695
      %v2987 = vpow.pop %v2986
      %v2988 = vmul.f32 %v2952, 1.442695
      %v2989 = vpow.pop %v2988
      %v2990 = vmul.f32 %v2953, 1.442695
      %v2991 = vpow.pop %v2990
      %v2992 = vmul.f32 %v2954, 1.442695
      %v2993 = vpow.pop %v2992
      %v2994 = vmul.f32 %v2955, 1.442695
      %v2995 = vpow.pop %v2994
      %v2996 = vmul.f32 %v2956, 1.442695
      %v2997 = vpow.pop %v2996
      %v2998 = vmul.f32 %v2957, 1.442695
      %v2999 = vpow.pop %v2998
      %v3000 = vmul.f32 %v2958, 1.442695
      %v3001 = vpow.pop %v3000
      %v3002 = vmul.f32 %v2959, 1.442695
      %v3003 = vpow.pop %v3002
      %v3004 = vmul.f32 %v2960, 1.442695
      %v3005 = vpow.pop %v3004
      %v3006 = vmul.f32 %v2961, 1.442695
      %v3007 = vpow.pop %v3006
      %v3008 = vmul.f32 %v2962, 1.442695
      %v3009 = vpow.pop %v3008
      %v3010 = vmul.f32 %v2963, 1.442695
      %v3011 = vpow.pop %v3010
      %v3012 = vmul.f32 %v2964, 1.442695
      %v3013 = vpow.pop %v3012
      %v3014 = vmul.f32 %v2965, 1.442695
      %v3015 = vpow.pop %v3014
      %v3016 = vmul.f32 %v2966, 1.442695
      %v3017 = vpow.pop %v3016
      %v3018 = vmul.f32 %v2967, 1.442695
      %v3019 = vpow.pop %v3018
      %v3020 = vmul.f32 %v2968, 1.442695
      %v3021 = vpow.pop %v3020
      %v3022 = vmul.f32 %v2969, 1.442695
      %v3023 = vpow.pop %v3022
      %v3024 = vmul.f32 %v2970, 1.442695
      %v3025 = vpow.pop %v3024
      %v3026 = vmul.f32 %v2971, 1.442695
      %v3027 = vpow.pop %v3026
      %v3028 = vmul.f32 %v2972, 1.442695
      %v3029 = vpow.pop %v3028
      %v3030 = vmul.f32 %v2973, 1.442695
      %v3031 = vpow.pop %v3030
      %v3032 = vmul.f32 %v2974, 1.442695
      %v3033 = vpow.pop %v3032
      %v3034 = vmul.f32 %v2975, 1.442695
      %v3035 = vpow.pop %v3034
      %v3036 = vmul.f32 %v2976, 1.442695
      %v3037 = vpow.pop %v3036
      %v3038 = vmul.f32 %v2977, 1.442695
      %v3039 = vpow.pop %v3038
      %v3040 = vmul.f32 %v2978, 1.442695
      %v3041 = vpow.pop %v3040
      %v3042 = vmul.f32 %v2979, 1.442695
      %v3043 = vpow.pop %v3042
      %v3044 = vadd.f32 %v2981, 1.0
      %v3045 = vadd.f32 %v2983, 1.0
      %v3046 = vadd.f32 %v2985, 1.0
      %v3047 = vadd.f32 %v2987, 1.0
      %v3048 = vadd.f32 %v2989, 1.0
      %v3049 = vadd.f32 %v2991, 1.0
      %v3050 = vadd.f32 %v2993, 1.0
      %v3051 = vadd.f32 %v2995, 1.0
      %v3052 = vadd.f32 %v2997, 1.0
      %v3053 = vadd.f32 %v2999, 1.0
      %v3054 = vadd.f32 %v3001, 1.0
      %v3055 = vadd.f32 %v3003, 1.0
      %v3056 = vadd.f32 %v3005, 1.0
      %v3057 = vadd.f32 %v3007, 1.0
      %v3058 = vadd.f32 %v3009, 1.0
      %v3059 = vadd.f32 %v3011, 1.0
      %v3060 = vadd.f32 %v3013, 1.0
      %v3061 = vadd.f32 %v3015, 1.0
      %v3062 = vadd.f32 %v3017, 1.0
      %v3063 = vadd.f32 %v3019, 1.0
      %v3064 = vadd.f32 %v3021, 1.0
      %v3065 = vadd.f32 %v3023, 1.0
      %v3066 = vadd.f32 %v3025, 1.0
      %v3067 = vadd.f32 %v3027, 1.0
      %v3068 = vadd.f32 %v3029, 1.0
      %v3069 = vadd.f32 %v3031, 1.0
      %v3070 = vadd.f32 %v3033, 1.0
      %v3071 = vadd.f32 %v3035, 1.0
      %v3072 = vadd.f32 %v3037, 1.0
      %v3073 = vadd.f32 %v3039, 1.0
      %v3074 = vadd.f32 %v3041, 1.0
      %v3075 = vadd.f32 %v3043, 1.0
      %v3076 = vrcp.pop %v3044
      %v3077 = vrcp.pop %v3045
      %v3078 = vrcp.pop %v3046
      %v3079 = vrcp.pop %v3047
      %v3080 = vrcp.pop %v3048
      %v3081 = vrcp.pop %v3049
      %v3082 = vrcp.pop %v3050
      %v3083 = vrcp.pop %v3051
      %v3084 = vrcp.pop %v3052
      %v3085 = vrcp.pop %v3053
      %v3086 = vrcp.pop %v3054
      %v3087 = vrcp.pop %v3055
      %v3088 = vrcp.pop %v3056
      %v3089 = vrcp.pop %v3057
      %v3090 = vrcp.pop %v3058
      %v3091 = vrcp.pop %v3059
      %v3092 = vrcp.pop %v3060
      %v3093 = vrcp.pop %v3061
      %v3094 = vrcp.pop %v3062
      %v3095 = vrcp.pop %v3063
      %v3096 = vrcp.pop %v3064
      %v3097 = vrcp.pop %v3065
      %v3098 = vrcp.pop %v3066
      %v3099 = vrcp.pop %v3067
      %v3100 = vrcp.pop %v3068
      %v3101 = vrcp.pop %v3069
      %v3102 = vrcp.pop %v3070
      %v3103 = vrcp.pop %v3071
      %v3104 = vrcp.pop %v3072
      %v3105 = vrcp.pop %v3073
      %v3106 = vrcp.pop %v3074
      %v3107 = vrcp.pop %v3075
      %v3108 = vmul.f32 %v2884, %v3076
      %v3109 = vmul.f32 %v2885, %v3077
      %v3110 = vmul.f32 %v2886, %v3078
      %v3111 = vmul.f32 %v2887, %v3079
      %v3112 = vmul.f32 %v2888, %v3080
      %v3113 = vmul.f32 %v2889, %v3081
      %v3114 = vmul.f32 %v2890, %v3082
      %v3115 = vmul.f32 %v2891, %v3083
      %v3116 = vmul.f32 %v2892, %v3084
      %v3117 = vmul.f32 %v2893, %v3085
      %v3118 = vmul.f32 %v2894, %v3086
      %v3119 = vmul.f32 %v2895, %v3087
      %v3120 = vmul.f32 %v2896, %v3088
      %v3121 = vmul.f32 %v2897, %v3089
      %v3122 = vmul.f32 %v2898, %v3090
      %v3123 = vmul.f32 %v2899, %v3091
      %v3124 = vmul.f32 %v2900, %v3092
      %v3125 = vmul.f32 %v2901, %v3093
      %v3126 = vmul.f32 %v2902, %v3094
      %v3127 = vmul.f32 %v2903, %v3095
      %v3128 = vmul.f32 %v2904, %v3096
      %v3129 = vmul.f32 %v2905, %v3097
      %v3130 = vmul.f32 %v2906, %v3098
      %v3131 = vmul.f32 %v2907, %v3099
      %v3132 = vmul.f32 %v2908, %v3100
      %v3133 = vmul.f32 %v2909, %v3101
      %v3134 = vmul.f32 %v2910, %v3102
      %v3135 = vmul.f32 %v2911, %v3103
      %v3136 = vmul.f32 %v2912, %v3104
      %v3137 = vmul.f32 %v2913, %v3105
      %v3138 = vmul.f32 %v2914, %v3106
      %v3139 = vmul.f32 %v2915, %v3107
      %v3140 = vpack.c.bf16 %v3109, %v3108
      %v3141 = vpack.c.bf16 %v3111, %v3110
      %v3142 = vpack.c.bf16 %v3113, %v3112
      %v3143 = vpack.c.bf16 %v3115, %v3114
      %v3144 = vpack.c.bf16 %v3117, %v3116
      %v3145 = vpack.c.bf16 %v3119, %v3118
      %v3146 = vpack.c.bf16 %v3121, %v3120
      %v3147 = vpack.c.bf16 %v3123, %v3122
      %v3148 = vpack.c.bf16 %v3125, %v3124
      %v3149 = vpack.c.bf16 %v3127, %v3126
      %v3150 = vpack.c.bf16 %v3129, %v3128
      %v3151 = vpack.c.bf16 %v3131, %v3130
      %v3152 = vpack.c.bf16 %v3133, %v3132
      %v3153 = vpack.c.bf16 %v3135, %v3134
      %v3154 = vpack.c.bf16 %v3137, %v3136
      %v3155 = vpack.c.bf16 %v3139, %v3138
      %v3172 = vunpack.c.l.b16 %v3140
      %v3173 = vunpack.c.h.b16 %v3140
      %v3174 = vunpack.c.l.b16 %v3141
      %v3175 = vunpack.c.h.b16 %v3141
      %v3176 = vunpack.c.l.b16 %v3142
      %v3177 = vunpack.c.h.b16 %v3142
      %v3178 = vunpack.c.l.b16 %v3143
      %v3179 = vunpack.c.h.b16 %v3143
      %v3180 = vunpack.c.l.b16 %v3144
      %v3181 = vunpack.c.h.b16 %v3144
      %v3182 = vunpack.c.l.b16 %v3145
      %v3183 = vunpack.c.h.b16 %v3145
      %v3184 = vunpack.c.l.b16 %v3146
      %v3185 = vunpack.c.h.b16 %v3146
      %v3186 = vunpack.c.l.b16 %v3147
      %v3187 = vunpack.c.h.b16 %v3147
      %v3188 = vunpack.c.l.b16 %v3148
      %v3189 = vunpack.c.h.b16 %v3148
      %v3190 = vunpack.c.l.b16 %v3149
      %v3191 = vunpack.c.h.b16 %v3149
      %v3192 = vunpack.c.l.b16 %v3150
      %v3193 = vunpack.c.h.b16 %v3150
      %v3194 = vunpack.c.l.b16 %v3151
      %v3195 = vunpack.c.h.b16 %v3151
      %v3196 = vunpack.c.l.b16 %v3152
      %v3197 = vunpack.c.h.b16 %v3152
      %v3198 = vunpack.c.l.b16 %v3153
      %v3199 = vunpack.c.h.b16 %v3153
      %v3200 = vunpack.c.l.b16 %v3154
      %v3201 = vunpack.c.h.b16 %v3154
      %v3202 = vunpack.c.l.b16 %v3155
      %v3203 = vunpack.c.h.b16 %v3155
      %v3204 = vpack.c.b16 %v3172, %v3172
      %v3205 = vpack.c.b16 %v3173, %v3173
      %v3206 = vpack.c.b16 %v3174, %v3174
      %v3207 = vpack.c.b16 %v3175, %v3175
      %v3208 = vpack.c.b16 %v3176, %v3176
      %v3209 = vpack.c.b16 %v3177, %v3177
      %v3210 = vpack.c.b16 %v3178, %v3178
      %v3211 = vpack.c.b16 %v3179, %v3179
      %v3212 = vpack.c.b16 %v3180, %v3180
      %v3213 = vpack.c.b16 %v3181, %v3181
      %v3214 = vpack.c.b16 %v3182, %v3182
      %v3215 = vpack.c.b16 %v3183, %v3183
      %v3216 = vpack.c.b16 %v3184, %v3184
      %v3217 = vpack.c.b16 %v3185, %v3185
      %v3218 = vpack.c.b16 %v3186, %v3186
      %v3219 = vpack.c.b16 %v3187, %v3187
      %v3220 = vpack.c.b16 %v3188, %v3188
      %v3221 = vpack.c.b16 %v3189, %v3189
      %v3222 = vpack.c.b16 %v3190, %v3190
      %v3223 = vpack.c.b16 %v3191, %v3191
      %v3224 = vpack.c.b16 %v3192, %v3192
      %v3225 = vpack.c.b16 %v3193, %v3193
      %v3226 = vpack.c.b16 %v3194, %v3194
      %v3227 = vpack.c.b16 %v3195, %v3195
      %v3228 = vpack.c.b16 %v3196, %v3196
      %v3229 = vpack.c.b16 %v3197, %v3197
      %v3230 = vpack.c.b16 %v3198, %v3198
      %v3231 = vpack.c.b16 %v3199, %v3199
      %v3232 = vpack.c.b16 %v3200, %v3200
      %v3233 = vpack.c.b16 %v3201, %v3201
      %v3234 = vpack.c.b16 %v3202, %v3202
      %v3235 = vpack.c.b16 %v3203, %v3203
      %3268 = vst [vmem:[%s291] sm:$0xf] %v3204
      %3269 = vst [vmem:[%s291 + $0x4] sm:$0xf] %v3205
      %3270 = vst [vmem:[%s291 + $0x8] sm:$0xf] %v3206
      %3271 = vst [vmem:[%s291 + $0xc] sm:$0xf] %v3207
      %3272 = vst [vmem:[%s291 + $0x10] sm:$0xf] %v3208
      %3273 = vst [vmem:[%s291 + $0x14] sm:$0xf] %v3209
      %3274 = vst [vmem:[%s291 + $0x18] sm:$0xf] %v3210
      %3275 = vst [vmem:[%s291 + $0x1c] sm:$0xf] %v3211
      %3276 = vst [vmem:[%s291 + $0x20] sm:$0xf] %v3212
      %3277 = vst [vmem:[%s291 + $0x24] sm:$0xf] %v3213
      %3278 = vst [vmem:[%s291 + $0x28] sm:$0xf] %v3214
      %3279 = vst [vmem:[%s291 + $0x2c] sm:$0xf] %v3215
      %3280 = vst [vmem:[%s291 + $0x30] sm:$0xf] %v3216
      %3281 = vst [vmem:[%s291 + $0x34] sm:$0xf] %v3217
      %3282 = vst [vmem:[%s291 + $0x38] sm:$0xf] %v3218
      %3283 = vst [vmem:[%s291 + $0x3c] sm:$0xf] %v3219
      %3284 = vst [vmem:[%s291 + $0x40] sm:$0xf] %v3220
      %3285 = vst [vmem:[%s291 + $0x44] sm:$0xf] %v3221
      %3286 = vst [vmem:[%s291 + $0x48] sm:$0xf] %v3222
      %3287 = vst [vmem:[%s291 + $0x4c] sm:$0xf] %v3223
      %3288 = vst [vmem:[%s291 + $0x50] sm:$0xf] %v3224
      %3289 = vst [vmem:[%s291 + $0x54] sm:$0xf] %v3225
      %3290 = vst [vmem:[%s291 + $0x58] sm:$0xf] %v3226
      %3291 = vst [vmem:[%s291 + $0x5c] sm:$0xf] %v3227
      %3292 = vst [vmem:[%s291 + $0x60] sm:$0xf] %v3228
      %3293 = vst [vmem:[%s291 + $0x64] sm:$0xf] %v3229
      %3294 = vst [vmem:[%s291 + $0x68] sm:$0xf] %v3230
      %3295 = vst [vmem:[%s291 + $0x6c] sm:$0xf] %v3231
      %3296 = vst [vmem:[%s291 + $0x70] sm:$0xf] %v3232
      %3297 = vst [vmem:[%s291 + $0x74] sm:$0xf] %v3233
      %3298 = vst [vmem:[%s291 + $0x78] sm:$0xf] %v3234
      %3299 = vst [vmem:[%s291 + $0x7c] sm:$0xf] %v3235
      %s3300 = smul.u32 32, %s20
      %p3301 = scmp.lt.s32.totalorder %s19, 1
      %s3302 = scalar_select %p3301, %s19, 1
      %p3303 = scmp.lt.s32.totalorder %s3300, 31
      %s3304 = scalar_select %p3303, %s3300, 31
      %s3305 = smul.addr %s3302, 32
      %s3306 = sadd.s32 %s3304, %s3305
      %s3307 = smul.addr %s3306, 4
      %s3308 = scalar_lea.vmem %s4, %s3307
      // Predicated region
      $region37: #{resblock_alt.1} parent=35 // pred_check
        %p3309 = pneg %p149
      $region38: #{resblock_alt.1} parent=35 // pred_check_branch
        %3311 = sbr.rel (%p3309) target = $region40
      $region39: #{resblock_alt.1} parent=35 // pred_region
        %s3312 = smul.u32 32, %s20
      $region40: #{resblock_alt.1} parent=35 // pred_fallthru
        _
    $region36: #{resblock_alt.1} parent=5 // pred_fallthru
      _
    %p3313 = scmp.le.s32.totalorder 2, %s10
    // Predicated region
    $region41: #{resblock_alt.1} parent=5 // pred_check
      %p3314 = pneg %p3313
    $region42: #{resblock_alt.1} parent=5 // pred_check_branch
      %3316 = sbr.rel (%p3314) target = $region44
    $region43: #{resblock_alt.1} parent=5 // pred_region
      %s3317 = ssub.s32 %s10, 2
      // Predicated region
      $region45: #{resblock_alt.1} parent=43 // pred_check
        %p3318 = pneg %p155
      $region46: #{resblock_alt.1} parent=43 // pred_check_branch
        %3320 = sbr.rel (%p3318) target = $region48
      $region47: #{resblock_alt.1} parent=43 // pred_region
        %s3321 = smul.u32 32, %s22
        %p3322 = scmp.lt.s32.totalorder %s21, 1
        %s3323 = scalar_select %p3322, %s21, 1
        %p3324 = scmp.lt.s32.totalorder %s3321, 31
        %s3325 = scalar_select %p3324, %s3321, 31
        %s3326 = smul.addr %s3323, 32
        %s3327 = sadd.s32 %s3325, %s3326
        %s3328 = smul.addr %s3327, 4
        %s3329 = scalar_lea.vmem %s4, %s3328
      $region48: #{resblock_alt.1} parent=43 // pred_fallthru
        _
    $region44: #{resblock_alt.1} parent=5 // pred_fallthru
      _
  $region6: #{resblock_alt.1} parent=0 // loop_footer
    %s14 = sadd.s32 1, %s10
  $region7: #{resblock_alt.1} parent=0 // loop_footer_branch
    %9 = sbr.rel target = $region3
  $region8: #{resblock_alt.1} parent=0 // loop_exit
    _

</llo_original>
